<compile_context>
chip_gen: v7x
topology: tpu7x:2x2x1
jax: 0.10.0
libtpu: 0.0.40
codegen_flags: <defaults>
</compile_context>

<pallas_src>
import functools
import math

import jax
import jax.numpy as jnp
from jax.experimental import pallas as pl
from jax.experimental.pallas import tpu as pltpu


def _round_up(x, m):
    return (x + m - 1) // m * m


# ---------------------------------------------------------------------------
# Kernel 1: fused matmul   out = maybe_relu((A @ B) * scale + shift)
#   bf16 operands on the MXU, f32 accumulation + epilogue.
#   Used for: stem 7x7 conv (im2col), stride-2 3x3 convs (im2col),
#             1x1 downsample convs, and all FC heads.
# ---------------------------------------------------------------------------

def _fused_mm_kernel(a_ref, b_ref, scale_ref, shift_ref, o_ref, *, relu):
    acc = jnp.dot(a_ref[...], b_ref[...], preferred_element_type=jnp.float32)
    acc = acc * scale_ref[...] + shift_ref[...]
    if relu:
        acc = jnp.maximum(acc, 0.0)
    o_ref[...] = acc.astype(o_ref.dtype)


def _pick_tile(dim, pref=256):
    """Tile size / padded size for one matmul dimension (256 to fill the MXU)."""
    if dim <= pref:
        return dim, dim                      # full-dim block, no padding
    if dim % pref == 0:
        return pref, dim
    return 128, _round_up(dim, 128)


def fused_matmul(a, b, scale, shift, relu=False, out_dtype=jnp.bfloat16):
    """maybe_relu((a @ b) * scale + shift); a:(M,K), b:(K,N) (bf16 MXU)."""
    M, K = a.shape
    K2, N = b.shape
    assert K == K2
    tm, Mp = _pick_tile(M)
    tn, Np = _pick_tile(N)
    a = a.astype(jnp.bfloat16)
    b = b.astype(jnp.bfloat16)
    scale = scale.astype(jnp.float32)
    shift = shift.astype(jnp.float32)
    if Mp != M:
        a = jnp.pad(a, ((0, Mp - M), (0, 0)))
    if Np != N:                              # never hit at these shapes
        b = jnp.pad(b, ((0, 0), (0, Np - N)))
        scale = jnp.pad(scale, (0, Np - N))
        shift = jnp.pad(shift, (0, Np - N))
    scale = scale.reshape(1, Np)
    shift = shift.reshape(1, Np)
    out = pl.pallas_call(
        functools.partial(_fused_mm_kernel, relu=relu),
        out_shape=jax.ShapeDtypeStruct((Mp, Np), out_dtype),
        grid=(Mp // tm, Np // tn),
        in_specs=[
            pl.BlockSpec((tm, K), lambda i, j: (i, 0)),   # A tile, full K
            pl.BlockSpec((K, tn), lambda i, j: (0, j)),   # B tile, full K
            pl.BlockSpec((1, tn), lambda i, j: (0, j)),   # per-channel scale
            pl.BlockSpec((1, tn), lambda i, j: (0, j)),   # per-channel shift
        ],
        out_specs=pl.BlockSpec((tm, tn), lambda i, j: (i, j)),
        compiler_params=pltpu.CompilerParams(
            dimension_semantics=("parallel", "parallel")),
    )(a, b, scale, shift)
    if (Mp, Np) != (M, N):
        out = out[:M, :N]
    return out


# ---------------------------------------------------------------------------
# Kernel 2: fused 3x3 / stride-1 conv + folded BN (+residual, +ReLU).
#   Only the zero-padded activation crosses HBM (no im2col blow-up).
#   The padded image is row-flattened with the row pitch Wp rounded up to 8,
#   so each of the 3 vertical taps is a sublane-aligned slice; the +1/+2
#   horizontal shifts are applied to the f32 dot results with XLU rolls.
#   Junk columns (Wo..Wp) are dropped in the per-row epilogue.
# ---------------------------------------------------------------------------

def _conv3x3_kernel(x_ref, w_ref, scale_ref, shift_ref, *rest,
                    Ho, Wo, Wp, relu, has_res):
    if has_res:
        res_ref, o_ref, acc_ref = rest
    else:
        o_ref, acc_ref = rest
    HoWp = Ho * Wp
    for di in range(3):
        xs = x_ref[0, pl.ds(di * Wp, HoWp), :]           # (Ho*Wp, Cin), aligned
        part = jnp.dot(xs, w_ref[3 * di],
                       preferred_element_type=jnp.float32)
        for dj in (1, 2):
            y = jnp.dot(xs, w_ref[3 * di + dj],
                        preferred_element_type=jnp.float32)
            # acc[r] needs y[r + dj]; roll by (HoWp - dj) == roll by -dj.
            part = part + pltpu.roll(y, shift=HoWp - dj, axis=0)
        if di == 0:
            acc_ref[...] = part
        else:
            acc_ref[...] = acc_ref[...] + part
    scale = scale_ref[...]                               # (1, Cout) f32
    shift = shift_ref[...]
    for ho in range(Ho):
        v = acc_ref[pl.ds(ho * Wp, Wo), :] * scale + shift
        if has_res:
            v = v + res_ref[0, ho].astype(jnp.float32)
        if relu:
            v = jnp.maximum(v, 0.0)
        o_ref[0, ho] = v.astype(o_ref.dtype)


def conv3x3_s1_bn(x, w9, scale, shift, relu, residual=None):
    """3x3 / stride-1 conv + folded BN (+residual add, +ReLU), NHWC.

    x: (N, H, W, Cin); w9: (9, Cin, Cout); residual: (N, H, W, Cout) or None.
    """
    N, H, W, Cin = x.shape
    Cout = w9.shape[-1]
    Ho, Wo = H, W
    Wp = _round_up(W + 2, 8)                 # row pitch: halo + 8-alignment
    xp = jnp.pad(x.astype(jnp.bfloat16),
                 ((0, 0), (1, 1), (1, Wp - W - 1), (0, 0)))
    x_flat = xp.reshape(N, (H + 2) * Wp, Cin)
    scale2 = scale.reshape(1, Cout).astype(jnp.float32)
    shift2 = shift.reshape(1, Cout).astype(jnp.float32)
    has_res = residual is not None
    in_specs = [
        pl.BlockSpec((1, (H + 2) * Wp, Cin), lambda n: (n, 0, 0)),
        pl.BlockSpec((9, Cin, Cout), lambda n: (0, 0, 0)),
        pl.BlockSpec((1, Cout), lambda n: (0, 0)),
        pl.BlockSpec((1, Cout), lambda n: (0, 0)),
    ]
    args = [x_flat, w9.astype(jnp.bfloat16), scale2, shift2]
    if has_res:
        in_specs.append(pl.BlockSpec((1, Ho, Wo, Cout), lambda n: (n, 0, 0, 0)))
        args.append(residual.astype(jnp.bfloat16))
    return pl.pallas_call(
        functools.partial(_conv3x3_kernel, Ho=Ho, Wo=Wo, Wp=Wp,
                          relu=relu, has_res=has_res),
        out_shape=jax.ShapeDtypeStruct((N, Ho, Wo, Cout), jnp.bfloat16),
        grid=(N,),
        in_specs=in_specs,
        out_specs=pl.BlockSpec((1, Ho, Wo, Cout), lambda n: (n, 0, 0, 0)),
        scratch_shapes=[pltpu.VMEM((Ho * Wp, Cout), jnp.float32)],
        compiler_params=pltpu.CompilerParams(
            dimension_semantics=("parallel",)),
    )(*args)


# ---------------------------------------------------------------------------
# Strided convs (stem 7x7/s2, three 3x3/s2, 1x1 downsamples): im2col + matmul.
# ---------------------------------------------------------------------------

def conv_im2col_bn(x, w2d, scale, shift, kh, kw, stride, padding, relu):
    # TODO(synk): the few strided convs still materialize im2col patches in
    #             HBM (2.25x of the input at stride 2); the stride-1 3x3 convs
    #             -- the bulk of the network -- use the fused kernel above.
    N, H, W, Cin = x.shape
    Cout = w2d.shape[1]
    Ho = (H + 2 * padding - kh) // stride + 1
    Wo = (W + 2 * padding - kw) // stride + 1
    if padding:
        x = jnp.pad(x, ((0, 0), (padding, padding), (padding, padding), (0, 0)))
    cols = []
    for di in range(kh):
        for dj in range(kw):
            cols.append(x[:, di:di + stride * (Ho - 1) + 1:stride,
                          dj:dj + stride * (Wo - 1) + 1:stride, :])
    patches = cols[0] if len(cols) == 1 else jnp.concatenate(cols, axis=-1)
    patches = patches.reshape(N * Ho * Wo, kh * kw * Cin)
    out = fused_matmul(patches, w2d, scale, shift, relu=relu,
                       out_dtype=jnp.bfloat16)
    return out.reshape(N, Ho, Wo, Cout)


# ---------------------------------------------------------------------------
# Pooling kernels
# ---------------------------------------------------------------------------

def _maxpool9_kernel(p_ref, o_ref):
    o_ref[...] = jnp.max(p_ref[...], axis=0)


def maxpool_3x3_s2_p1(x):
    """3x3 / stride 2 / pad 1 max-pool (NHWC).  Input is post-ReLU (>=0), so
    zero padding is equivalent to -inf padding."""
    # TODO(synk): the 9 shifted views are still stacked in HBM (tiny tensor at
    #             these shapes); an in-kernel shifted-read variant would remove it.
    N, H, W, C = x.shape
    Ho = (H + 2 - 3) // 2 + 1
    Wo = (W + 2 - 3) // 2 + 1
    xp = jnp.pad(x, ((0, 0), (1, 1), (1, 1), (0, 0)))
    views = [xp[:, di:di + 2 * Ho - 1:2, dj:dj + 2 * Wo - 1:2, :]
             for di in range(3) for dj in range(3)]
    M = N * Ho * Wo
    patches = jnp.stack(views, axis=0).reshape(9, M, C)
    tm = min(512, _round_up(M, 8))
    Mp = _round_up(M, tm)
    if Mp != M:
        patches = jnp.pad(patches, ((0, 0), (0, Mp - M), (0, 0)))
    out = pl.pallas_call(
        _maxpool9_kernel,
        out_shape=jax.ShapeDtypeStruct((Mp, C), x.dtype),
        grid=(Mp // tm,),
        in_specs=[pl.BlockSpec((9, tm, C), lambda i: (0, i, 0))],
        out_specs=pl.BlockSpec((tm, C), lambda i: (i, 0)),
        compiler_params=pltpu.CompilerParams(
            dimension_semantics=("parallel",)),
    )(patches)
    return out[:M].reshape(N, Ho, Wo, C)


def _gap_kernel(x_ref, o_ref):
    o_ref[...] = jnp.mean(x_ref[...].astype(jnp.float32), axis=1, keepdims=True)


def global_avgpool(x):
    """(N, H, W, C) -> (N, C) spatial mean (AdaptiveAvgPool2d((1, 1)))."""
    N, H, W, C = x.shape
    out = pl.pallas_call(
        _gap_kernel,
        out_shape=jax.ShapeDtypeStruct((N, 1, C), jnp.float32),
    )(x.reshape(N, H * W, C))
    return out.reshape(N, C)


# ---------------------------------------------------------------------------
# Deterministic synthetic parameters (shapes from the module); weights are
# pre-reshaped / pre-cast to their kernel layouts ONCE here.
# ---------------------------------------------------------------------------

def _kaiming_conv(key, kh, kw, cin, cout):
    std = math.sqrt(2.0 / (kh * kw * cin))
    return std * jax.random.normal(key, (kh, kw, cin, cout), jnp.float32)


def make_bn(key, c, eps=1e-5):
    # eval-mode BN (running_mean=0, running_var=1) folded into scale/shift
    k1, k2 = jax.random.split(key)
    gamma = 1.0 + 0.02 * jax.random.normal(k1, (c,), jnp.float32)
    beta = 0.02 * jax.random.normal(k2, (c,), jnp.float32)
    return gamma / jnp.sqrt(1.0 + eps), beta


def make_linear(key, cin, cout, std=None, zero_bias=False):
    k1, k2 = jax.random.split(key)
    if std is None:
        std = math.sqrt(2.0 / cin)
    w = (std * jax.random.normal(k1, (cin, cout), jnp.float32)
         ).astype(jnp.bfloat16)
    b = (jnp.zeros((cout,), jnp.float32) if zero_bias
         else 0.01 * jax.random.normal(k2, (cout,), jnp.float32))
    return w, b


def init_basic_block(key, cin, cout, stride):
    ks = jax.random.split(key, 6)
    p = {}
    w1 = _kaiming_conv(ks[0], 3, 3, cin, cout)
    if stride == 1:
        p["conv1_w"] = w1.reshape(9, cin, cout).astype(jnp.bfloat16)
    else:
        p["conv1_w2d"] = w1.reshape(9 * cin, cout).astype(jnp.bfloat16)
    p["bn1"] = make_bn(ks[1], cout)
    p["conv2_w"] = _kaiming_conv(ks[2], 3, 3, cout, cout).reshape(
        9, cout, cout).astype(jnp.bfloat16)
    p["bn2"] = make_bn(ks[3], cout)
    if stride != 1 or cin != cout:
        p["down_w"] = _kaiming_conv(ks[4], 1, 1, cin, cout).reshape(
            cin, cout).astype(jnp.bfloat16)
        p["down_bn"] = make_bn(ks[5], cout)
    return p


def init_layer(key, cin, cout, blocks, stride):
    ks = jax.random.split(key, blocks)
    ps = [init_basic_block(ks[0], cin, cout, stride)]
    for k in ks[1:]:
        ps.append(init_basic_block(k, cout, cout, 1))
    return ps


def init_mixsim(key, class_num):
    ks = jax.random.split(key, 13)
    P = {}
    P["conv1_w"] = _kaiming_conv(ks[0], 7, 7, 3, 64).reshape(
        7 * 7 * 3, 64).astype(jnp.bfloat16)
    P["bn1"] = make_bn(ks[1], 64)
    P["layer1"] = init_layer(ks[2], 64, 64, 2, 1)        # ResNet-18 layers
    P["layer2"] = init_layer(ks[3], 64, 128, 2, 2)
    P["layer3"] = init_layer(ks[4], 128, 256, 2, 2)
    P["layer4"] = init_layer(ks[5], 256, 512, 2, 2)
    # proj_head_used: Linear(512, 512) + ReLU
    P["proj_u_w"], P["proj_u_b"] = make_linear(ks[6], 512, 512)
    # proj_head_disc: Linear(512, 1024) + BN1d(1024) + ReLU + Linear(1024, 256)
    P["disc_fc1_w"], P["disc_fc1_b"] = make_linear(ks[7], 512, 1024)
    P["disc_bn"] = make_bn(ks[8], 1024)
    P["disc_fc2_w"], P["disc_fc2_b"] = make_linear(ks[9], 1024, 256)
    # ClassBlock(512, class_num): Linear(512,512)+BN1d+ReLU+Dropout, Linear
    # (weights_init_classifier: std=0.001, bias=0)
    P["cls_fc1_w"], P["cls_fc1_b"] = make_linear(ks[10], 512, 512,
                                                 std=0.001, zero_bias=True)
    P["cls_bn"] = make_bn(ks[11], 512)
    P["cls_fc2_w"], P["cls_fc2_b"] = make_linear(ks[12], 512, class_num,
                                                 std=0.001, zero_bias=True)
    return P


# ---------------------------------------------------------------------------
# Forward pass (one full-batch pass; see TODO about the device pipeline split)
# ---------------------------------------------------------------------------

def basic_block(x, p):
    if "conv1_w" in p:                               # stride-1 first conv
        out = conv3x3_s1_bn(x, p["conv1_w"], *p["bn1"], relu=True)
    else:                                            # stride-2 first conv
        out = conv_im2col_bn(x, p["conv1_w2d"], *p["bn1"],
                             kh=3, kw=3, stride=2, padding=1, relu=True)
    if "down_w" in p:                                # 1x1/s2 downsample + BN
        xs = x[:, ::2, ::2, :]
        N, Hs, Ws, Cin = xs.shape
        Cout = p["down_w"].shape[1]
        ident = fused_matmul(xs.reshape(N * Hs * Ws, Cin), p["down_w"],
                             *p["down_bn"], relu=False, out_dtype=jnp.bfloat16)
        identity = ident.reshape(N, Hs, Ws, Cout)
    else:
        identity = x
    # BN + residual add + final ReLU fused into conv2's epilogue
    return conv3x3_s1_bn(out, p["conv2_w"], *p["bn2"], relu=True,
                         residual=identity)


def mixsim_forward(P, x_nchw):
    # NCHW (PyTorch) -> NHWC; bf16 activations throughout the backbone
    x = jnp.transpose(x_nchw, (0, 2, 3, 1)).astype(jnp.bfloat16)
    # seq1: conv1 + bn1 + relu + maxpool + layer1
    x = conv_im2col_bn(x, P["conv1_w"], *P["bn1"], kh=7, kw=7, stride=2,
                       padding=3, relu=True)
    x = maxpool_3x3_s2_p1(x)
    for blk in P["layer1"]:
        x = basic_block(x, blk)
    # seq2: layer2..layer4 + global average pool
    for name in ("layer2", "layer3", "layer4"):
        for blk in P[name]:
            x = basic_block(x, blk)
    fea = global_avgpool(x)                                   # (N, 512) f32
    # proj_head_used: Linear + ReLU
    proj = fused_matmul(fea, P["proj_u_w"],
                        jnp.ones((512,), jnp.float32), P["proj_u_b"],
                        relu=True, out_dtype=jnp.float32)
    # proj_head_disc: Linear + BN1d + ReLU + Linear
    s, t = P["disc_bn"]
    h = fused_matmul(proj, P["disc_fc1_w"], s, s * P["disc_fc1_b"] + t,
                     relu=True, out_dtype=jnp.float32)
    pre = fused_matmul(h, P["disc_fc2_w"],
                       jnp.ones((P["disc_fc2_b"].shape[0],), jnp.float32),
                       P["disc_fc2_b"], relu=False, out_dtype=jnp.float32)
    # classifier (ClassBlock): Linear + BN1d + ReLU + Dropout(eval=id) + Linear
    s, t = P["cls_bn"]
    hc = fused_matmul(proj, P["cls_fc1_w"], s, s * P["cls_fc1_b"] + t,
                      relu=True, out_dtype=jnp.float32)
    pred = fused_matmul(hc, P["cls_fc2_w"],
                        jnp.ones((P["cls_fc2_b"].shape[0],), jnp.float32),
                        P["cls_fc2_b"], relu=False, out_dtype=jnp.float32)
    return pre, pred


if __name__ == "__main__":
    class_num = 10
    key = jax.random.PRNGKey(0)
    pkey, xkey, ckey = jax.random.split(key, 3)

    # --- quick numeric self-check of the fused 3x3 conv kernel ---------------
    ck1, ck2 = jax.random.split(ckey)
    cx = jax.random.normal(ck1, (2, 8, 8, 64), jnp.float32).astype(jnp.bfloat16)
    cw = (0.05 * jax.random.normal(ck2, (3, 3, 64, 64), jnp.float32)
          ).astype(jnp.bfloat16)
    got = conv3x3_s1_bn(cx, cw.reshape(9, 64, 64),
                        jnp.ones((64,), jnp.float32),
                        jnp.zeros((64,), jnp.float32), relu=False)
    ref = jax.lax.conv_general_dilated(
        cx.astype(jnp.float32), cw.astype(jnp.float32),
        window_strides=(1, 1), padding=((1, 1), (1, 1)),
        dimension_numbers=("NHWC", "HWIO", "NHWC"))
    err = float(jnp.max(jnp.abs(got.astype(jnp.float32) - ref)))
    assert err < 0.1, f"conv3x3 kernel mismatch: {err}"

    # --- full MixSim_Model forward -------------------------------------------
    params = init_mixsim(pkey, class_num)
    # NCHW input; small but deep enough for ResNet-18's 5 downsamplings
    x = jax.random.normal(xkey, (2, 3, 64, 64), jnp.float32)
    forward = jax.jit(mixsim_forward)
    pre, pred = forward(params, x)
    jax.block_until_ready((pre, pred))
    assert pre.shape == (2, 256), pre.shape
    assert pred.shape == (2, class_num), pred.shape
    assert bool(jnp.isfinite(pre).all()) and bool(jnp.isfinite(pred).all())
    print("KERNEL_OK")
</pallas_src>

<mosaic_0001>
module attributes {stable_mosaic.version = 11 : i64} {
  func.func @_conv3x3_kernel(%arg0: i32, %arg1: memref<1x160x64xbf16, #tpu.memory_space<vmem>>, %arg2: memref<9x64x64xbf16, #tpu.memory_space<vmem>>, %arg3: memref<1x64xf32, #tpu.memory_space<vmem>>, %arg4: memref<1x64xf32, #tpu.memory_space<vmem>>, %arg5: memref<1x8x8x64xbf16, #tpu.memory_space<vmem>>, %arg6: memref<128x64xf32, #tpu.memory_space<vmem>>) attributes {dimension_semantics = [#tpu.dimension_semantics<parallel>], iteration_bounds = array<i64: 2>, scalar_prefetch = 0 : i64, scratch_operands = 1 : i64, tpu.core_type = #tpu.core_type<tc>, window_params = [{transform_indices = @transform_0, window_bounds = array<i64: 1, 160, 64>}, {pipeline_mode = #tpu.pipeline_mode<synchronous>, transform_indices = @transform_1, window_bounds = array<i64: 9, 64, 64>}, {pipeline_mode = #tpu.pipeline_mode<synchronous>, transform_indices = @transform_2, window_bounds = array<i64: 1, 64>}, {pipeline_mode = #tpu.pipeline_mode<synchronous>, transform_indices = @transform_3, window_bounds = array<i64: 1, 64>}, {transform_indices = @transform_4, window_bounds = array<i64: 1, 8, 8, 64>}]} {
    %c0 = arith.constant 0 : index
    %c0_0 = arith.constant 0 : index
    %c0_1 = arith.constant 0 : index
    %0 = vector.load %arg1[%c0, %c0_0, %c0_1] : memref<1x160x64xbf16, #tpu.memory_space<vmem>>, vector<1x128x64xbf16>
    %1 = vector.shape_cast %0 : vector<1x128x64xbf16> to vector<128x64xbf16>
    %c0_2 = arith.constant 0 : index
    %c0_3 = arith.constant 0 : index
    %c0_4 = arith.constant 0 : index
    %2 = vector.load %arg2[%c0_2, %c0_3, %c0_4] : memref<9x64x64xbf16, #tpu.memory_space<vmem>>, vector<1x64x64xbf16>
    %3 = vector.shape_cast %2 : vector<1x64x64xbf16> to vector<64x64xbf16>
    %cst = arith.constant dense<0.000000e+00> : vector<128x64xf32>
    %4 = tpu.matmul %1, %3, %cst {dimension_numbers = #tpu.dot_dimension_numbers<[1], [0], [0], [1], [0, 0, 1, 1], [], []>} : vector<128x64xbf16>, vector<64x64xbf16>, vector<128x64xf32> -> vector<128x64xf32>
    %c1 = arith.constant 1 : index
    %c0_5 = arith.constant 0 : index
    %c0_6 = arith.constant 0 : index
    %5 = vector.load %arg2[%c1, %c0_5, %c0_6] : memref<9x64x64xbf16, #tpu.memory_space<vmem>>, vector<1x64x64xbf16>
    %6 = vector.shape_cast %5 : vector<1x64x64xbf16> to vector<64x64xbf16>
    %cst_7 = arith.constant dense<0.000000e+00> : vector<128x64xf32>
    %7 = tpu.matmul %1, %6, %cst_7 {dimension_numbers = #tpu.dot_dimension_numbers<[1], [0], [0], [1], [0, 0, 1, 1], [], []>} : vector<128x64xbf16>, vector<64x64xbf16>, vector<128x64xf32> -> vector<128x64xf32>
    %c127_i32 = arith.constant 127 : i32
    %8 = tpu.dynamic_rotate %7 by %c127_i32 dim 0 : vector<128x64xf32>, i32 -> vector<128x64xf32>
    %9 = arith.addf %4, %8 : vector<128x64xf32>
    %c2 = arith.constant 2 : index
    %c0_8 = arith.constant 0 : index
    %c0_9 = arith.constant 0 : index
    %10 = vector.load %arg2[%c2, %c0_8, %c0_9] : memref<9x64x64xbf16, #tpu.memory_space<vmem>>, vector<1x64x64xbf16>
    %11 = vector.shape_cast %10 : vector<1x64x64xbf16> to vector<64x64xbf16>
    %cst_10 = arith.constant dense<0.000000e+00> : vector<128x64xf32>
    %12 = tpu.matmul %1, %11, %cst_10 {dimension_numbers = #tpu.dot_dimension_numbers<[1], [0], [0], [1], [0, 0, 1, 1], [], []>} : vector<128x64xbf16>, vector<64x64xbf16>, vector<128x64xf32> -> vector<128x64xf32>
    %c126_i32 = arith.constant 126 : i32
    %13 = tpu.dynamic_rotate %12 by %c126_i32 dim 0 : vector<128x64xf32>, i32 -> vector<128x64xf32>
    %14 = arith.addf %9, %13 : vector<128x64xf32>
    %c0_11 = arith.constant 0 : index
    %c0_12 = arith.constant 0 : index
    %15 = vector.load %arg6[%c0_11, %c0_12] : memref<128x64xf32, #tpu.memory_space<vmem>>, vector<128x64xf32>
    tpu.vector_store %arg6[%c0_11, %c0_12], %14 {strides = array<i32>} : memref<128x64xf32, #tpu.memory_space<vmem>>, vector<128x64xf32>,
    %c0_13 = arith.constant 0 : index
    %c16 = arith.constant 16 : index
    %c0_14 = arith.constant 0 : index
    %16 = vector.load %arg1[%c0_13, %c16, %c0_14] : memref<1x160x64xbf16, #tpu.memory_space<vmem>>, vector<1x128x64xbf16>
    %17 = vector.shape_cast %16 : vector<1x128x64xbf16> to vector<128x64xbf16>
    %c3 = arith.constant 3 : index
    %c0_15 = arith.constant 0 : index
    %c0_16 = arith.constant 0 : index
    %18 = vector.load %arg2[%c3, %c0_15, %c0_16] : memref<9x64x64xbf16, #tpu.memory_space<vmem>>, vector<1x64x64xbf16>
    %19 = vector.shape_cast %18 : vector<1x64x64xbf16> to vector<64x64xbf16>
    %cst_17 = arith.constant dense<0.000000e+00> : vector<128x64xf32>
    %20 = tpu.matmul %17, %19, %cst_17 {dimension_numbers = #tpu.dot_dimension_numbers<[1], [0], [0], [1], [0, 0, 1, 1], [], []>} : vector<128x64xbf16>, vector<64x64xbf16>, vector<128x64xf32> -> vector<128x64xf32>
    %c4 = arith.constant 4 : index
    %c0_18 = arith.constant 0 : index
    %c0_19 = arith.constant 0 : index
    %21 = vector.load %arg2[%c4, %c0_18, %c0_19] : memref<9x64x64xbf16, #tpu.memory_space<vmem>>, vector<1x64x64xbf16>
    %22 = vector.shape_cast %21 : vector<1x64x64xbf16> to vector<64x64xbf16>
    %cst_20 = arith.constant dense<0.000000e+00> : vector<128x64xf32>
    %23 = tpu.matmul %17, %22, %cst_20 {dimension_numbers = #tpu.dot_dimension_numbers<[1], [0], [0], [1], [0, 0, 1, 1], [], []>} : vector<128x64xbf16>, vector<64x64xbf16>, vector<128x64xf32> -> vector<128x64xf32>
    %c127_i32_21 = arith.constant 127 : i32
    %24 = tpu.dynamic_rotate %23 by %c127_i32_21 dim 0 : vector<128x64xf32>, i32 -> vector<128x64xf32>
    %25 = arith.addf %20, %24 : vector<128x64xf32>
    %c5 = arith.constant 5 : index
    %c0_22 = arith.constant 0 : index
    %c0_23 = arith.constant 0 : index
    %26 = vector.load %arg2[%c5, %c0_22, %c0_23] : memref<9x64x64xbf16, #tpu.memory_space<vmem>>, vector<1x64x64xbf16>
    %27 = vector.shape_cast %26 : vector<1x64x64xbf16> to vector<64x64xbf16>
    %cst_24 = arith.constant dense<0.000000e+00> : vector<128x64xf32>
    %28 = tpu.matmul %17, %27, %cst_24 {dimension_numbers = #tpu.dot_dimension_numbers<[1], [0], [0], [1], [0, 0, 1, 1], [], []>} : vector<128x64xbf16>, vector<64x64xbf16>, vector<128x64xf32> -> vector<128x64xf32>
    %c126_i32_25 = arith.constant 126 : i32
    %29 = tpu.dynamic_rotate %28 by %c126_i32_25 dim 0 : vector<128x64xf32>, i32 -> vector<128x64xf32>
    %30 = arith.addf %25, %29 : vector<128x64xf32>
    %c0_26 = arith.constant 0 : index
    %c0_27 = arith.constant 0 : index
    %31 = vector.load %arg6[%c0_26, %c0_27] : memref<128x64xf32, #tpu.memory_space<vmem>>, vector<128x64xf32>
    %32 = arith.addf %31, %30 : vector<128x64xf32>
    %c0_28 = arith.constant 0 : index
    %c0_29 = arith.constant 0 : index
    %33 = vector.load %arg6[%c0_28, %c0_29] : memref<128x64xf32, #tpu.memory_space<vmem>>, vector<128x64xf32>
    tpu.vector_store %arg6[%c0_28, %c0_29], %32 {strides = array<i32>} : memref<128x64xf32, #tpu.memory_space<vmem>>, vector<128x64xf32>,
    %c0_30 = arith.constant 0 : index
    %c32 = arith.constant 32 : index
    %c0_31 = arith.constant 0 : index
    %34 = vector.load %arg1[%c0_30, %c32, %c0_31] : memref<1x160x64xbf16, #tpu.memory_space<vmem>>, vector<1x128x64xbf16>
    %35 = vector.shape_cast %34 : vector<1x128x64xbf16> to vector<128x64xbf16>
    %c6 = arith.constant 6 : index
    %c0_32 = arith.constant 0 : index
    %c0_33 = arith.constant 0 : index
    %36 = vector.load %arg2[%c6, %c0_32, %c0_33] : memref<9x64x64xbf16, #tpu.memory_space<vmem>>, vector<1x64x64xbf16>
    %37 = vector.shape_cast %36 : vector<1x64x64xbf16> to vector<64x64xbf16>
    %cst_34 = arith.constant dense<0.000000e+00> : vector<128x64xf32>
    %38 = tpu.matmul %35, %37, %cst_34 {dimension_numbers = #tpu.dot_dimension_numbers<[1], [0], [0], [1], [0, 0, 1, 1], [], []>} : vector<128x64xbf16>, vector<64x64xbf16>, vector<128x64xf32> -> vector<128x64xf32>
    %c7 = arith.constant 7 : index
    %c0_35 = arith.constant 0 : index
    %c0_36 = arith.constant 0 : index
    %39 = vector.load %arg2[%c7, %c0_35, %c0_36] : memref<9x64x64xbf16, #tpu.memory_space<vmem>>, vector<1x64x64xbf16>
    %40 = vector.shape_cast %39 : vector<1x64x64xbf16> to vector<64x64xbf16>
    %cst_37 = arith.constant dense<0.000000e+00> : vector<128x64xf32>
    %41 = tpu.matmul %35, %40, %cst_37 {dimension_numbers = #tpu.dot_dimension_numbers<[1], [0], [0], [1], [0, 0, 1, 1], [], []>} : vector<128x64xbf16>, vector<64x64xbf16>, vector<128x64xf32> -> vector<128x64xf32>
    %c127_i32_38 = arith.constant 127 : i32
    %42 = tpu.dynamic_rotate %41 by %c127_i32_38 dim 0 : vector<128x64xf32>, i32 -> vector<128x64xf32>
    %43 = arith.addf %38, %42 : vector<128x64xf32>
    %c8 = arith.constant 8 : index
    %c0_39 = arith.constant 0 : index
    %c0_40 = arith.constant 0 : index
    %44 = vector.load %arg2[%c8, %c0_39, %c0_40] : memref<9x64x64xbf16, #tpu.memory_space<vmem>>, vector<1x64x64xbf16>
    %45 = vector.shape_cast %44 : vector<1x64x64xbf16> to vector<64x64xbf16>
    %cst_41 = arith.constant dense<0.000000e+00> : vector<128x64xf32>
    %46 = tpu.matmul %35, %45, %cst_41 {dimension_numbers = #tpu.dot_dimension_numbers<[1], [0], [0], [1], [0, 0, 1, 1], [], []>} : vector<128x64xbf16>, vector<64x64xbf16>, vector<128x64xf32> -> vector<128x64xf32>
    %c126_i32_42 = arith.constant 126 : i32
    %47 = tpu.dynamic_rotate %46 by %c126_i32_42 dim 0 : vector<128x64xf32>, i32 -> vector<128x64xf32>
    %48 = arith.addf %43, %47 : vector<128x64xf32>
    %c0_43 = arith.constant 0 : index
    %c0_44 = arith.constant 0 : index
    %49 = vector.load %arg6[%c0_43, %c0_44] : memref<128x64xf32, #tpu.memory_space<vmem>>, vector<128x64xf32>
    %50 = arith.addf %49, %48 : vector<128x64xf32>
    %c0_45 = arith.constant 0 : index
    %c0_46 = arith.constant 0 : index
    %51 = vector.load %arg6[%c0_45, %c0_46] : memref<128x64xf32, #tpu.memory_space<vmem>>, vector<128x64xf32>
    tpu.vector_store %arg6[%c0_45, %c0_46], %50 {strides = array<i32>} : memref<128x64xf32, #tpu.memory_space<vmem>>, vector<128x64xf32>,
    %c0_47 = arith.constant 0 : index
    %c0_48 = arith.constant 0 : index
    %52 = vector.load %arg3[%c0_47, %c0_48] : memref<1x64xf32, #tpu.memory_space<vmem>>, vector<1x64xf32>
    %c0_49 = arith.constant 0 : index
    %c0_50 = arith.constant 0 : index
    %53 = vector.load %arg4[%c0_49, %c0_50] : memref<1x64xf32, #tpu.memory_space<vmem>>, vector<1x64xf32>
    %c0_51 = arith.constant 0 : index
    %c0_52 = arith.constant 0 : index
    %54 = vector.load %arg6[%c0_51, %c0_52] : memref<128x64xf32, #tpu.memory_space<vmem>>, vector<8x64xf32>
    %55 = vector.broadcast %52 : vector<1x64xf32> to vector<8x64xf32>
    %56 = arith.mulf %54, %55 : vector<8x64xf32>
    %57 = vector.broadcast %53 : vector<1x64xf32> to vector<8x64xf32>
    %58 = arith.addf %56, %57 : vector<8x64xf32>
    %59 = arith.truncf %58 : vector<8x64xf32> to vector<8x64xbf16>
    %c0_53 = arith.constant 0 : index
    %c0_54 = arith.constant 0 : index
    %c0_55 = arith.constant 0 : index
    %c0_56 = arith.constant 0 : index
    %60 = vector.load %arg5[%c0_53, %c0_54, %c0_55, %c0_56] : memref<1x8x8x64xbf16, #tpu.memory_space<vmem>>, vector<1x1x8x64xbf16>
    %61 = vector.shape_cast %60 : vector<1x1x8x64xbf16> to vector<8x64xbf16>
    %62 = vector.shape_cast %59 : vector<8x64xbf16> to vector<1x1x8x64xbf16>
    tpu.vector_store %arg5[%c0_53, %c0_54, %c0_55, %c0_56], %62 {strides = array<i32>} : memref<1x8x8x64xbf16, #tpu.memory_space<vmem>>, vector<1x1x8x64xbf16>,
    %c16_57 = arith.constant 16 : index
    %c0_58 = arith.constant 0 : index
    %63 = vector.load %arg6[%c16_57, %c0_58] : memref<128x64xf32, #tpu.memory_space<vmem>>, vector<8x64xf32>
    %64 = vector.broadcast %52 : vector<1x64xf32> to vector<8x64xf32>
    %65 = arith.mulf %63, %64 : vector<8x64xf32>
    %66 = vector.broadcast %53 : vector<1x64xf32> to vector<8x64xf32>
    %67 = arith.addf %65, %66 : vector<8x64xf32>
    %68 = arith.truncf %67 : vector<8x64xf32> to vector<8x64xbf16>
    %c0_59 = arith.constant 0 : index
    %c1_60 = arith.constant 1 : index
    %c0_61 = arith.constant 0 : index
    %c0_62 = arith.constant 0 : index
    %69 = vector.load %arg5[%c0_59, %c1_60, %c0_61, %c0_62] : memref<1x8x8x64xbf16, #tpu.memory_space<vmem>>, vector<1x1x8x64xbf16>
    %70 = vector.shape_cast %69 : vector<1x1x8x64xbf16> to vector<8x64xbf16>
    %71 = vector.shape_cast %68 : vector<8x64xbf16> to vector<1x1x8x64xbf16>
    tpu.vector_store %arg5[%c0_59, %c1_60, %c0_61, %c0_62], %71 {strides = array<i32>} : memref<1x8x8x64xbf16, #tpu.memory_space<vmem>>, vector<1x1x8x64xbf16>,
    %c32_63 = arith.constant 32 : index
    %c0_64 = arith.constant 0 : index
    %72 = vector.load %arg6[%c32_63, %c0_64] : memref<128x64xf32, #tpu.memory_space<vmem>>, vector<8x64xf32>
    %73 = vector.broadcast %52 : vector<1x64xf32> to vector<8x64xf32>
    %74 = arith.mulf %72, %73 : vector<8x64xf32>
    %75 = vector.broadcast %53 : vector<1x64xf32> to vector<8x64xf32>
    %76 = arith.addf %74, %75 : vector<8x64xf32>
    %77 = arith.truncf %76 : vector<8x64xf32> to vector<8x64xbf16>
    %c0_65 = arith.constant 0 : index
    %c2_66 = arith.constant 2 : index
    %c0_67 = arith.constant 0 : index
    %c0_68 = arith.constant 0 : index
    %78 = vector.load %arg5[%c0_65, %c2_66, %c0_67, %c0_68] : memref<1x8x8x64xbf16, #tpu.memory_space<vmem>>, vector<1x1x8x64xbf16>
    %79 = vector.shape_cast %78 : vector<1x1x8x64xbf16> to vector<8x64xbf16>
    %80 = vector.shape_cast %77 : vector<8x64xbf16> to vector<1x1x8x64xbf16>
    tpu.vector_store %arg5[%c0_65, %c2_66, %c0_67, %c0_68], %80 {strides = array<i32>} : memref<1x8x8x64xbf16, #tpu.memory_space<vmem>>, vector<1x1x8x64xbf16>,
    %c48 = arith.constant 48 : index
    %c0_69 = arith.constant 0 : index
    %81 = vector.load %arg6[%c48, %c0_69] : memref<128x64xf32, #tpu.memory_space<vmem>>, vector<8x64xf32>
    %82 = vector.broadcast %52 : vector<1x64xf32> to vector<8x64xf32>
    %83 = arith.mulf %81, %82 : vector<8x64xf32>
    %84 = vector.broadcast %53 : vector<1x64xf32> to vector<8x64xf32>
    %85 = arith.addf %83, %84 : vector<8x64xf32>
    %86 = arith.truncf %85 : vector<8x64xf32> to vector<8x64xbf16>
    %c0_70 = arith.constant 0 : index
    %c3_71 = arith.constant 3 : index
    %c0_72 = arith.constant 0 : index
    %c0_73 = arith.constant 0 : index
    %87 = vector.load %arg5[%c0_70, %c3_71, %c0_72, %c0_73] : memref<1x8x8x64xbf16, #tpu.memory_space<vmem>>, vector<1x1x8x64xbf16>
    %88 = vector.shape_cast %87 : vector<1x1x8x64xbf16> to vector<8x64xbf16>
    %89 = vector.shape_cast %86 : vector<8x64xbf16> to vector<1x1x8x64xbf16>
    tpu.vector_store %arg5[%c0_70, %c3_71, %c0_72, %c0_73], %89 {strides = array<i32>} : memref<1x8x8x64xbf16, #tpu.memory_space<vmem>>, vector<1x1x8x64xbf16>,
    %c64 = arith.constant 64 : index
    %c0_74 = arith.constant 0 : index
    %90 = vector.load %arg6[%c64, %c0_74] : memref<128x64xf32, #tpu.memory_space<vmem>>, vector<8x64xf32>
    %91 = vector.broadcast %52 : vector<1x64xf32> to vector<8x64xf32>
    %92 = arith.mulf %90, %91 : vector<8x64xf32>
    %93 = vector.broadcast %53 : vector<1x64xf32> to vector<8x64xf32>
    %94 = arith.addf %92, %93 : vector<8x64xf32>
    %95 = arith.truncf %94 : vector<8x64xf32> to vector<8x64xbf16>
    %c0_75 = arith.constant 0 : index
    %c4_76 = arith.constant 4 : index
    %c0_77 = arith.constant 0 : index
    %c0_78 = arith.constant 0 : index
    %96 = vector.load %arg5[%c0_75, %c4_76, %c0_77, %c0_78] : memref<1x8x8x64xbf16, #tpu.memory_space<vmem>>, vector<1x1x8x64xbf16>
    %97 = vector.shape_cast %96 : vector<1x1x8x64xbf16> to vector<8x64xbf16>
    %98 = vector.shape_cast %95 : vector<8x64xbf16> to vector<1x1x8x64xbf16>
    tpu.vector_store %arg5[%c0_75, %c4_76, %c0_77, %c0_78], %98 {strides = array<i32>} : memref<1x8x8x64xbf16, #tpu.memory_space<vmem>>, vector<1x1x8x64xbf16>,
    %c80 = arith.constant 80 : index
    %c0_79 = arith.constant 0 : index
    %99 = vector.load %arg6[%c80, %c0_79] : memref<128x64xf32, #tpu.memory_space<vmem>>, vector<8x64xf32>
    %100 = vector.broadcast %52 : vector<1x64xf32> to vector<8x64xf32>
    %101 = arith.mulf %99, %100 : vector<8x64xf32>
    %102 = vector.broadcast %53 : vector<1x64xf32> to vector<8x64xf32>
    %103 = arith.addf %101, %102 : vector<8x64xf32>
    %104 = arith.truncf %103 : vector<8x64xf32> to vector<8x64xbf16>
    %c0_80 = arith.constant 0 : index
    %c5_81 = arith.constant 5 : index
    %c0_82 = arith.constant 0 : index
    %c0_83 = arith.constant 0 : index
    %105 = vector.load %arg5[%c0_80, %c5_81, %c0_82, %c0_83] : memref<1x8x8x64xbf16, #tpu.memory_space<vmem>>, vector<1x1x8x64xbf16>
    %106 = vector.shape_cast %105 : vector<1x1x8x64xbf16> to vector<8x64xbf16>
    %107 = vector.shape_cast %104 : vector<8x64xbf16> to vector<1x1x8x64xbf16>
    tpu.vector_store %arg5[%c0_80, %c5_81, %c0_82, %c0_83], %107 {strides = array<i32>} : memref<1x8x8x64xbf16, #tpu.memory_space<vmem>>, vector<1x1x8x64xbf16>,
    %c96 = arith.constant 96 : index
    %c0_84 = arith.constant 0 : index
    %108 = vector.load %arg6[%c96, %c0_84] : memref<128x64xf32, #tpu.memory_space<vmem>>, vector<8x64xf32>
    %109 = vector.broadcast %52 : vector<1x64xf32> to vector<8x64xf32>
    %110 = arith.mulf %108, %109 : vector<8x64xf32>
    %111 = vector.broadcast %53 : vector<1x64xf32> to vector<8x64xf32>
    %112 = arith.addf %110, %111 : vector<8x64xf32>
    %113 = arith.truncf %112 : vector<8x64xf32> to vector<8x64xbf16>
    %c0_85 = arith.constant 0 : index
    %c6_86 = arith.constant 6 : index
    %c0_87 = arith.constant 0 : index
    %c0_88 = arith.constant 0 : index
    %114 = vector.load %arg5[%c0_85, %c6_86, %c0_87, %c0_88] : memref<1x8x8x64xbf16, #tpu.memory_space<vmem>>, vector<1x1x8x64xbf16>
    %115 = vector.shape_cast %114 : vector<1x1x8x64xbf16> to vector<8x64xbf16>
    %116 = vector.shape_cast %113 : vector<8x64xbf16> to vector<1x1x8x64xbf16>
    tpu.vector_store %arg5[%c0_85, %c6_86, %c0_87, %c0_88], %116 {strides = array<i32>} : memref<1x8x8x64xbf16, #tpu.memory_space<vmem>>, vector<1x1x8x64xbf16>,
    %c112 = arith.constant 112 : index
    %c0_89 = arith.constant 0 : index
    %117 = vector.load %arg6[%c112, %c0_89] : memref<128x64xf32, #tpu.memory_space<vmem>>, vector<8x64xf32>
    %118 = vector.broadcast %52 : vector<1x64xf32> to vector<8x64xf32>
    %119 = arith.mulf %117, %118 : vector<8x64xf32>
    %120 = vector.broadcast %53 : vector<1x64xf32> to vector<8x64xf32>
    %121 = arith.addf %119, %120 : vector<8x64xf32>
    %122 = arith.truncf %121 : vector<8x64xf32> to vector<8x64xbf16>
    %c0_90 = arith.constant 0 : index
    %c7_91 = arith.constant 7 : index
    %c0_92 = arith.constant 0 : index
    %c0_93 = arith.constant 0 : index
    %123 = vector.load %arg5[%c0_90, %c7_91, %c0_92, %c0_93] : memref<1x8x8x64xbf16, #tpu.memory_space<vmem>>, vector<1x1x8x64xbf16>
    %124 = vector.shape_cast %123 : vector<1x1x8x64xbf16> to vector<8x64xbf16>
    %125 = vector.shape_cast %122 : vector<8x64xbf16> to vector<1x1x8x64xbf16>
    tpu.vector_store %arg5[%c0_90, %c7_91, %c0_92, %c0_93], %125 {strides = array<i32>} : memref<1x8x8x64xbf16, #tpu.memory_space<vmem>>, vector<1x1x8x64xbf16>,
    return
  }
  func.func @transform_0(%arg0: i32) -> (i32, i32, i32) {
    %c0_i32 = arith.constant 0 : i32
    %c0_i32_0 = arith.constant 0 : i32
    %c0_i32_1 = arith.constant 0 : i32
    return %arg0, %c0_i32, %c0_i32_0 : i32, i32, i32
  }
  func.func @transform_1(%arg0: i32) -> (i32, i32, i32) {
    %c0_i32 = arith.constant 0 : i32
    %c0_i32_0 = arith.constant 0 : i32
    %c0_i32_1 = arith.constant 0 : i32
    %c0_i32_2 = arith.constant 0 : i32
    return %c0_i32, %c0_i32_0, %c0_i32_1 : i32, i32, i32
  }
  func.func @transform_2(%arg0: i32) -> (i32, i32) {
    %c0_i32 = arith.constant 0 : i32
    %c0_i32_0 = arith.constant 0 : i32
    %c0_i32_1 = arith.constant 0 : i32
    return %c0_i32, %c0_i32_0 : i32, i32
  }
  func.func @transform_3(%arg0: i32) -> (i32, i32) {
    %c0_i32 = arith.constant 0 : i32
    %c0_i32_0 = arith.constant 0 : i32
    %c0_i32_1 = arith.constant 0 : i32
    return %c0_i32, %c0_i32_0 : i32, i32
  }
  func.func @transform_4(%arg0: i32) -> (i32, i32, i32, i32) {
    %c0_i32 = arith.constant 0 : i32
    %c0_i32_0 = arith.constant 0 : i32
    %c0_i32_1 = arith.constant 0 : i32
    %c0_i32_2 = arith.constant 0 : i32
    return %arg0, %c0_i32, %c0_i32_0, %c0_i32_1 : i32, i32, i32, i32
  }
}

</mosaic_0001>

<llo_original>
// kernel: tpu_custom_call.1
$region0: #{tpu_custom_call.1}
  #allocation0 [shape = 'u32[]', space=smem, size = 0x4, offset = 0x4, fixed_abs, tag = 'smem constant byte address 0x4 - core index']
  #allocation1 [shape = 'u32[144,128]{1,0:T(1,128)}', space=vmem, size = 0x12000, scoped, tag = 'internal scratch']
  #allocation2 [shape = 'f32[128,64]{1,0:T(8,128)}', space=vmem, size = 0x10000, scoped, tag = 'scratch operand']
  %s0 = inlined_call_operand.vmem [shape: bf16[2,160,64], index: 0, kind: input, shape index: {}]
  %s1 = inlined_call_operand.vmem [shape: bf16[9,64,64], index: 1, kind: input, shape index: {}]
  %s2 = inlined_call_operand.vmem [shape: f32[1,64], index: 2, kind: input, shape index: {}]
  %s3 = inlined_call_operand.vmem [shape: f32[1,64], index: 3, kind: input, shape index: {}]
  %s4 = inlined_call_operand.hbm [shape: bf16[2,8,8,64], index: 4, kind: output, shape index: {}]
  %s5 = sld [smem:[#allocation0]]
  $region49: #{tpu_custom_call.1} parent=0
    _
  %s7 = ssub.s32 1, %s5
  %s8 = scalar_select 0, %s7, %s5
  $region1: #{tpu_custom_call.1} parent=0
    #allocation3 [shape = 'u8[32768]{0}', space=vmem, size = 0x8000, scoped, tag = 'output window, operand 0']
    #allocation4 [shape = 's32[2]{0}', space=sflag, size = 0x8, scoped, tag = 'scoped memory for tpu_custom_call.1']
    %9 = vsyncpa [#allocation4], 0
    %s10 = scalar_lea.sflag [#allocation4], 1
    %11 = vsyncpa %s10, 0
    loop: start=0, step=1, limit=4
    $region2: #{tpu_custom_call.1} parent=1 // loop_pre_header
      _
    $region3: #{tpu_custom_call.1} parent=1 // loop_header
      %s13 = sphi 0, %s17
      %p14 = scmp.ge.s32.totalorder %s13, 4
      %s23 = sphi 0, %s25
      %s26 = sphi 0, %s23
      %s27 = sphi 0, %s26
      %s43 = sphi 0, %s27
      %s47 = sphi 0, %s47
      %s49 = sphi 0, %s47
      %s50 = sphi 0, %s49
      %s64 = sphi 0, %s50
      %s68 = sphi 0, %s68
      %s70 = sphi 0, %s68
      %s71 = sphi 0, %s70
      %s85 = sphi 0, %s71
      %s89 = sphi 0, %s89
      %s91 = sphi 0, %s89
      %s92 = sphi 0, %s91
      %s106 = sphi 0, %s92
      %s112 = sphi 0, %s114
      %s115 = sphi 0, %s112
      %s116 = sphi 0, %s115
      %s132 = sphi 0, %s116
    $region4: #{tpu_custom_call.1} parent=1 // loop_header_branch
      %16 = sbr.rel (%p14) target = $region8
    $region5: #{tpu_custom_call.1} parent=1 // loop_body
      %s18 = ssub.s32 %s13, 1
      %s19 = ssub.s32 %s13, 2
      %s20 = sadd.s32 %s13, 1
      %s21 = ssub.s32 %s13, %s20
      %p22 = scmp.eq.s32.totalorder %s21, 0
      %s24 = sadd.s32 %s23, 1
      %s25 = scalar_select %p22, %s23, %s24
      %p28 = pneg %p22
      %p29 = scmp.eq.s32.totalorder %s13, 1
      %p30 = por %p28, %p29
      %p31 = scmp.ne.s32.totalorder %s23, %s26
      %p32 = scmp.eq.s32.totalorder %s13, 0
      %p33 = por %p31, %p32
      %p34 = scmp.ne.s32.totalorder %s23, %s26
      %p35 = scmp.eq.s32.totalorder %s18, 1
      %p36 = por %p34, %p35
      %p37 = scmp.ne.s32.totalorder %s26, %s27
      %p38 = scmp.eq.s32.totalorder %s18, 0
      %p39 = por %p37, %p38
      %p40 = scmp.ne.s32.totalorder %s26, %s27
      %p41 = scmp.eq.s32.totalorder %s19, 1
      %p42 = por %p40, %p41
      %p44 = scmp.ne.s32.totalorder %s27, %s43
      %p45 = scmp.eq.s32.totalorder %s19, 0
      %p46 = por %p44, %p45
      %s48 = sadd.s32 %s47, 1
      %p51 = scmp.eq.s32.totalorder %s13, 1
      %p52 = scmp.ne.s32.totalorder %s47, %s49
      %p53 = scmp.eq.s32.totalorder %s13, 0
      %p54 = por %p52, %p53
      %p55 = scmp.ne.s32.totalorder %s47, %s49
      %p56 = scmp.eq.s32.totalorder %s18, 1
      %p57 = por %p55, %p56
      %p58 = scmp.ne.s32.totalorder %s49, %s50
      %p59 = scmp.eq.s32.totalorder %s18, 0
      %p60 = por %p58, %p59
      %p61 = scmp.ne.s32.totalorder %s49, %s50
      %p62 = scmp.eq.s32.totalorder %s19, 1
      %p63 = por %p61, %p62
      %p65 = scmp.ne.s32.totalorder %s50, %s64
      %p66 = scmp.eq.s32.totalorder %s19, 0
      %p67 = por %p65, %p66
      %s69 = sadd.s32 %s68, 1
      %p72 = scmp.eq.s32.totalorder %s13, 1
      %p73 = scmp.ne.s32.totalorder %s68, %s70
      %p74 = scmp.eq.s32.totalorder %s13, 0
      %p75 = por %p73, %p74
      %p76 = scmp.ne.s32.totalorder %s68, %s70
      %p77 = scmp.eq.s32.totalorder %s18, 1
      %p78 = por %p76, %p77
      %p79 = scmp.ne.s32.totalorder %s70, %s71
      %p80 = scmp.eq.s32.totalorder %s18, 0
      %p81 = por %p79, %p80
      %p82 = scmp.ne.s32.totalorder %s70, %s71
      %p83 = scmp.eq.s32.totalorder %s19, 1
      %p84 = por %p82, %p83
      %p86 = scmp.ne.s32.totalorder %s71, %s85
      %p87 = scmp.eq.s32.totalorder %s19, 0
      %p88 = por %p86, %p87
      %s90 = sadd.s32 %s89, 1
      %p93 = scmp.eq.s32.totalorder %s13, 1
      %p94 = scmp.ne.s32.totalorder %s89, %s91
      %p95 = scmp.eq.s32.totalorder %s13, 0
      %p96 = por %p94, %p95
      %p97 = scmp.ne.s32.totalorder %s89, %s91
      %p98 = scmp.eq.s32.totalorder %s18, 1
      %p99 = por %p97, %p98
      %p100 = scmp.ne.s32.totalorder %s91, %s92
      %p101 = scmp.eq.s32.totalorder %s18, 0
      %p102 = por %p100, %p101
      %p103 = scmp.ne.s32.totalorder %s91, %s92
      %p104 = scmp.eq.s32.totalorder %s19, 1
      %p105 = por %p103, %p104
      %p107 = scmp.ne.s32.totalorder %s92, %s106
      %p108 = scmp.eq.s32.totalorder %s19, 0
      %p109 = por %p107, %p108
      %s110 = ssub.s32 %s13, %s20
      %p111 = scmp.eq.s32.totalorder %s110, 0
      %s113 = sadd.s32 %s112, 1
      %s114 = scalar_select %p111, %s112, %s113
      %p117 = pneg %p111
      %p118 = scmp.eq.s32.totalorder %s13, 1
      %p119 = por %p117, %p118
      %p120 = scmp.ne.s32.totalorder %s112, %s115
      %p121 = scmp.eq.s32.totalorder %s13, 0
      %p122 = por %p120, %p121
      %p123 = scmp.ne.s32.totalorder %s112, %s115
      %p124 = scmp.eq.s32.totalorder %s18, 1
      %p125 = por %p123, %p124
      %p126 = scmp.ne.s32.totalorder %s115, %s116
      %p127 = scmp.eq.s32.totalorder %s18, 0
      %p128 = por %p126, %p127
      %p129 = scmp.ne.s32.totalorder %s115, %s116
      %p130 = scmp.eq.s32.totalorder %s19, 1
      %p131 = por %p129, %p130
      %p133 = scmp.ne.s32.totalorder %s116, %s132
      %p134 = scmp.eq.s32.totalorder %s19, 0
      %p135 = por %p133, %p134
      %p136 = scmp.le.s32.totalorder 1, %s13
      %p137 = scmp.lt.s32.totalorder %s13, 3
      %p138 = pnand %p136, %p137
      %p139 = pneg %p138
      // Predicated region
      $region9: #{tpu_custom_call.1} parent=5 // pred_check
        _
      $region10: #{tpu_custom_call.1} parent=5 // pred_check_branch
        %141 = sbr.rel (%p138) target = $region12
      $region11: #{tpu_custom_call.1} parent=5 // pred_region
        %s142 = ssub.s32 %s13, 1
        // Predicated region
        $region13: #{tpu_custom_call.1} parent=11 // pred_check
          %p143 = pneg %p60
        $region14: #{tpu_custom_call.1} parent=11 // pred_check_branch
          %145 = sbr.rel (%p143) target = $region16
        $region15: #{tpu_custom_call.1} parent=11 // pred_region
          _
        $region16: #{tpu_custom_call.1} parent=11 // pred_fallthru
          _
        // Predicated region
        $region17: #{tpu_custom_call.1} parent=11 // pred_check
          %p146 = pneg %p81
        $region18: #{tpu_custom_call.1} parent=11 // pred_check_branch
          %148 = sbr.rel (%p146) target = $region20
        $region19: #{tpu_custom_call.1} parent=11 // pred_region
          _
        $region20: #{tpu_custom_call.1} parent=11 // pred_fallthru
          _
        // Predicated region
        $region21: #{tpu_custom_call.1} parent=11 // pred_check
          %p149 = pneg %p102
        $region22: #{tpu_custom_call.1} parent=11 // pred_check_branch
          %151 = sbr.rel (%p149) target = $region24
        $region23: #{tpu_custom_call.1} parent=11 // pred_region
          _
        $region24: #{tpu_custom_call.1} parent=11 // pred_fallthru
          _
      $region12: #{tpu_custom_call.1} parent=5 // pred_fallthru
        _
      %p152 = scmp.lt.s32.totalorder %s13, 2
      // Predicated region
      $region25: #{tpu_custom_call.1} parent=5 // pred_check
        %p153 = pneg %p152
      $region26: #{tpu_custom_call.1} parent=5 // pred_check_branch
        %155 = sbr.rel (%p153) target = $region28
      $region27: #{tpu_custom_call.1} parent=5 // pred_region
        // Predicated region
        $region29: #{tpu_custom_call.1} parent=27 // pred_check
          %p156 = pneg %p33
        $region30: #{tpu_custom_call.1} parent=27 // pred_check_branch
          %158 = sbr.rel (%p156) target = $region32
        $region31: #{tpu_custom_call.1} parent=27 // pred_region
          %p159 = scmp.lt.s32.totalorder %s13, 1
          %s160 = scalar_select %p159, %s13, 1
          %s161 = smul.addr %s160, 20
          %s162 = smul.addr %s161, 4
          %s163 = scalar_lea.vmem %s0, %s162
        $region32: #{tpu_custom_call.1} parent=27 // pred_fallthru
          _
      $region28: #{tpu_custom_call.1} parent=5 // pred_fallthru
        _
      %p164 = scmp.le.s32.totalorder 1, %s13
      %p165 = scmp.lt.s32.totalorder %s13, 3
      %p166 = pnand %p164, %p165
      %p167 = pneg %p166
      // Predicated region
      $region33: #{tpu_custom_call.1} parent=5 // pred_check
        _
      $region34: #{tpu_custom_call.1} parent=5 // pred_check_branch
        %169 = sbr.rel (%p166) target = $region36
      $region35: #{tpu_custom_call.1} parent=5 // pred_region
        %s170 = ssub.s32 %s13, 1
        %p171 = scmp.lt.s32.totalorder %s18, 1
        %s172 = scalar_select %p171, %s18, 1
        %s173 = smul.addr %s172, 20
        %s174 = smul.addr %s173, 4
        %s175 = scalar_lea.vmem %s0, %s174
        %p176 = pneg %p39
        %p177 = pneg %p36
        %p178 = pneg %p60
        %p179 = pneg %p57
        %p180 = pneg %p81
        %p181 = pneg %p78
        %p182 = pneg %p102
        %p183 = pneg %p99
        %p184 = pneg %p128
        %p185 = pneg %p125
        %s186 = sand.u32 %s115, 1
        %s187 = scalar_lea.sflag [#allocation4], %s186
        %s188 = sand.u32 %s115, 1
        %s189 = smul.addr %s188, 32
        %s190 = scalar_lea.vmem [#allocation3], %s189
        %p191 = scmp.lt.s32.totalorder %s18, 1
        %s192 = scalar_select %p191, %s18, 1
        %s193 = smul.addr %s192, 20
        %s194 = smul.addr %s193, 4
        %s195 = scalar_lea.vmem %s0, %s194
        %v197 = vld [vmem:[%s195] sm:$0xf]
        %v198 = vld [vmem:[%s195 + $0x4] sm:$0xf]
        %v199 = vld [vmem:[%s195 + $0x8] sm:$0xf]
        %v200 = vld [vmem:[%s195 + $0xc] sm:$0xf]
        %v201 = vld [vmem:[%s195 + $0x10] sm:$0xf]
        %v202 = vld [vmem:[%s195 + $0x14] sm:$0xf]
        %v203 = vld [vmem:[%s195 + $0x18] sm:$0xf]
        %v204 = vld [vmem:[%s195 + $0x1c] sm:$0xf]
        %v205 = vld [vmem:[%s195 + $0x20] sm:$0xf]
        %v206 = vld [vmem:[%s195 + $0x24] sm:$0xf]
        %v207 = vld [vmem:[%s195 + $0x28] sm:$0xf]
        %v208 = vld [vmem:[%s195 + $0x2c] sm:$0xf]
        %v209 = vld [vmem:[%s195 + $0x30] sm:$0xf]
        %v210 = vld [vmem:[%s195 + $0x34] sm:$0xf]
        %v211 = vld [vmem:[%s195 + $0x38] sm:$0xf]
        %v212 = vld [vmem:[%s195 + $0x3c] sm:$0xf]
        %v213 = vld [vmem:[%s1] sm:$0xf]
        %v214 = vld [vmem:[%s1 + $0x4] sm:$0xf]
        %v215 = vld [vmem:[%s1 + $0x8] sm:$0xf]
        %v216 = vld [vmem:[%s1 + $0xc] sm:$0xf]
        %v217 = vld [vmem:[%s1 + $0x10] sm:$0xf]
        %v218 = vld [vmem:[%s1 + $0x14] sm:$0xf]
        %v219 = vld [vmem:[%s1 + $0x18] sm:$0xf]
        %v220 = vld [vmem:[%s1 + $0x1c] sm:$0xf]
        %s221 = scalar_lea.vmem %s1, 32
        %v222 = vld [vmem:[%s221] sm:$0xf]
        %v223 = vld [vmem:[%s221 + $0x4] sm:$0xf]
        %v224 = vld [vmem:[%s221 + $0x8] sm:$0xf]
        %v225 = vld [vmem:[%s221 + $0xc] sm:$0xf]
        %v226 = vld [vmem:[%s221 + $0x10] sm:$0xf]
        %v227 = vld [vmem:[%s221 + $0x14] sm:$0xf]
        %v228 = vld [vmem:[%s221 + $0x18] sm:$0xf]
        %v229 = vld [vmem:[%s221 + $0x1c] sm:$0xf]
        %v246 = vunpack.c.l.b16 %v197
        %v247 = vunpack.c.l.b16 %v198
        %v248 = vunpack.c.l.b16 %v199
        %v249 = vunpack.c.l.b16 %v200
        %v250 = vunpack.c.l.b16 %v201
        %v251 = vunpack.c.l.b16 %v202
        %v252 = vunpack.c.l.b16 %v203
        %v253 = vunpack.c.l.b16 %v204
        %v254 = vunpack.c.l.b16 %v205
        %v255 = vunpack.c.l.b16 %v206
        %v256 = vunpack.c.l.b16 %v207
        %v257 = vunpack.c.l.b16 %v208
        %v258 = vunpack.c.l.b16 %v209
        %v259 = vunpack.c.l.b16 %v210
        %v260 = vunpack.c.l.b16 %v211
        %v261 = vunpack.c.l.b16 %v212
        %v262 = vpack.c.b16 %v247, %v246
        %v263 = vpack.c.b16 %v249, %v248
        %v264 = vpack.c.b16 %v251, %v250
        %v265 = vpack.c.b16 %v253, %v252
        %v266 = vpack.c.b16 %v255, %v254
        %v267 = vpack.c.b16 %v257, %v256
        %v268 = vpack.c.b16 %v259, %v258
        %v269 = vpack.c.b16 %v261, %v260
        %v278 = vunpack.c.l.b16 %v222
        %v279 = vunpack.c.l.b16 %v223
        %v280 = vunpack.c.l.b16 %v224
        %v281 = vunpack.c.l.b16 %v225
        %v282 = vunpack.c.l.b16 %v226
        %v283 = vunpack.c.l.b16 %v227
        %v284 = vunpack.c.l.b16 %v228
        %v285 = vunpack.c.l.b16 %v229
        %v286 = vpack.c.b16 %v279, %v278
        %v287 = vpack.c.b16 %v281, %v280
        %v288 = vpack.c.b16 %v283, %v282
        %v289 = vpack.c.b16 %v285, %v284
        %vm294 = vcmask 523264
        %v296 = vsel %vm294, %v262, 0
        %v299 = vsel %vm294, %v263, 0
        %v302 = vsel %vm294, %v264, 0
        %v305 = vsel %vm294, %v265, 0
        %v308 = vsel %vm294, %v266, 0
        %v311 = vsel %vm294, %v267, 0
        %v314 = vsel %vm294, %v268, 0
        %v317 = vsel %vm294, %v269, 0
        %319 = vmatprep.subr.bf16.mxu0 0
        %320 = vmatpush1.bf16.msra.mxu0 %v286
        %321 = vmatprep.subr.bf16.mxu0 0
        %322 = vmatpush1.bf16.msra.mxu0 %v287
        %323 = vmatprep.subr.bf16.mxu0 0
        %324 = vmatpush1.bf16.msra.mxu0 %v288
        %325 = vmatprep.subr.bf16.mxu0 0
        %326 = vmatpush1.bf16.msra.mxu0 %v289
        %327 = vmatprep.subr.bf16.mxu0 0
        %328 = vmatpush1.bf16.msra.mxu0 0
        %329 = vmatprep.subr.bf16.mxu0 0
        %330 = vmatpush1.bf16.msra.mxu0 0
        %331 = vmatprep.subr.bf16.mxu0 0
        %332 = vmatpush1.bf16.msra.mxu0 0
        %333 = vmatprep.subr.bf16.mxu0 0
        %334 = vmatpush1.bf16.msra.mxu0 0
        %335 = vmatprep.subr.bf16.mxu0 0
        %336 = vmatpush1.bf16.msra.mxu0 0
        %337 = vmatprep.subr.bf16.mxu0 0
        %338 = vmatpush1.bf16.msra.mxu0 0
        %339 = vmatprep.subr.bf16.mxu0 0
        %340 = vmatpush1.bf16.msra.mxu0 0
        %341 = vmatprep.subr.bf16.mxu0 0
        %342 = vmatpush1.bf16.msra.mxu0 0
        %343 = vmatprep.subr.bf16.mxu0 0
        %344 = vmatpush1.bf16.msra.mxu0 0
        %345 = vmatprep.subr.bf16.mxu0 0
        %346 = vmatpush1.bf16.msra.mxu0 0
        %347 = vmatprep.subr.bf16.mxu0 0
        %348 = vmatpush1.bf16.msra.mxu0 0
        %349 = vmatprep.subr.bf16.mxu0 0
        %350 = vmatpush1.bf16.msra.mxu0 0
        %351 = vmatprep.mubr.bf16.mxu0 0
        %352 = vmatmul.mubr.bf16.gmra.mrb[0].mxu0 %v296
        %v353 = vpop.f32.mrb[0].mxu0
        %v354 = vadd.f32 0.0, %v353
        %v355 = vpop.f32.mrb[0].mxu0
        %v356 = vpop.f32.mrb[0].mxu0
        %v357 = vadd.f32 0.0, %v356
        %v358 = vpop.f32.mrb[0].mxu0
        %359 = vmatprep.mubr.bf16.mxu0 0
        %360 = vmatmul.mubr.bf16.gmra.mrb[0].mxu0 %v299
        %v361 = vpop.f32.mrb[0].mxu0
        %v362 = vadd.f32 0.0, %v361
        %v363 = vpop.f32.mrb[0].mxu0
        %v364 = vpop.f32.mrb[0].mxu0
        %v365 = vadd.f32 0.0, %v364
        %v366 = vpop.f32.mrb[0].mxu0
        %367 = vmatprep.mubr.bf16.mxu0 0
        %368 = vmatmul.mubr.bf16.gmra.mrb[0].mxu0 %v302
        %v369 = vpop.f32.mrb[0].mxu0
        %v370 = vadd.f32 0.0, %v369
        %v371 = vpop.f32.mrb[0].mxu0
        %v372 = vpop.f32.mrb[0].mxu0
        %v373 = vadd.f32 0.0, %v372
        %v374 = vpop.f32.mrb[0].mxu0
        %375 = vmatprep.mubr.bf16.mxu0 0
        %376 = vmatmul.mubr.bf16.gmra.mrb[0].mxu0 %v305
        %v377 = vpop.f32.mrb[0].mxu0
        %v378 = vadd.f32 0.0, %v377
        %v379 = vpop.f32.mrb[0].mxu0
        %v380 = vpop.f32.mrb[0].mxu0
        %v381 = vadd.f32 0.0, %v380
        %v382 = vpop.f32.mrb[0].mxu0
        %383 = vmatprep.mubr.bf16.mxu0 0
        %384 = vmatmul.mubr.bf16.gmra.mrb[0].mxu0 %v308
        %v385 = vpop.f32.mrb[0].mxu0
        %v386 = vadd.f32 0.0, %v385
        %v387 = vpop.f32.mrb[0].mxu0
        %v388 = vpop.f32.mrb[0].mxu0
        %v389 = vadd.f32 0.0, %v388
        %v390 = vpop.f32.mrb[0].mxu0
        %391 = vmatprep.mubr.bf16.mxu0 0
        %392 = vmatmul.mubr.bf16.gmra.mrb[0].mxu0 %v311
        %v393 = vpop.f32.mrb[0].mxu0
        %v394 = vadd.f32 0.0, %v393
        %v395 = vpop.f32.mrb[0].mxu0
        %v396 = vpop.f32.mrb[0].mxu0
        %v397 = vadd.f32 0.0, %v396
        %v398 = vpop.f32.mrb[0].mxu0
        %399 = vmatprep.mubr.bf16.mxu0 0
        %400 = vmatmul.mubr.bf16.gmra.mrb[0].mxu0 %v314
        %v401 = vpop.f32.mrb[0].mxu0
        %v402 = vadd.f32 0.0, %v401
        %v403 = vpop.f32.mrb[0].mxu0
        %v404 = vpop.f32.mrb[0].mxu0
        %v405 = vadd.f32 0.0, %v404
        %v406 = vpop.f32.mrb[0].mxu0
        %407 = vmatprep.mubr.bf16.mxu0 0
        %408 = vmatmul.mubr.bf16.gmra.mrb[0].mxu0 %v317
        %v409 = vpop.f32.mrb[0].mxu0
        %v410 = vadd.f32 0.0, %v409
        %v411 = vpop.f32.mrb[0].mxu0
        %v412 = vpop.f32.mrb[0].mxu0
        %v413 = vadd.f32 0.0, %v412
        %v414 = vpop.f32.mrb[0].mxu0
        %415 = vdwg.mxu0
        %v416 = vrot.slane %v354, 1
        %v417 = vrot.slane %v357, 1
        %v418 = vrot.slane %v362, 1
        %v419 = vrot.slane %v365, 1
        %v420 = vrot.slane %v370, 1
        %v421 = vrot.slane %v373, 1
        %v422 = vrot.slane %v378, 1
        %v423 = vrot.slane %v381, 1
        %v424 = vrot.slane %v386, 1
        %v425 = vrot.slane %v389, 1
        %v426 = vrot.slane %v394, 1
        %v427 = vrot.slane %v397, 1
        %v428 = vrot.slane %v402, 1
        %v429 = vrot.slane %v405, 1
        %v430 = vrot.slane %v410, 1
        %v431 = vrot.slane %v413, 1
        %v432 = vlaneseq
        %v433 = vshrl.u32 %v432, 7
        %vm434 = vcmp.lt.s32.totalorder %v433, 7
        %v435 = vsel %vm434, %v430, %v431
        %v436 = vsel %vm434, %v429, %v430
        %v437 = vsel %vm434, %v428, %v429
        %v438 = vsel %vm434, %v427, %v428
        %v439 = vsel %vm434, %v426, %v427
        %v440 = vsel %vm434, %v425, %v426
        %v441 = vsel %vm434, %v424, %v425
        %v442 = vsel %vm434, %v423, %v424
        %v443 = vsel %vm434, %v422, %v423
        %v444 = vsel %vm434, %v421, %v422
        %v445 = vsel %vm434, %v420, %v421
        %v446 = vsel %vm434, %v419, %v420
        %v447 = vsel %vm434, %v418, %v419
        %v448 = vsel %vm434, %v417, %v418
        %v449 = vsel %vm434, %v416, %v417
        %v450 = vsel %vm434, %v431, %v416
        %v459 = vunpack.c.l.b16 %v213
        %v460 = vunpack.c.l.b16 %v214
        %v461 = vunpack.c.l.b16 %v215
        %v462 = vunpack.c.l.b16 %v216
        %v463 = vunpack.c.l.b16 %v217
        %v464 = vunpack.c.l.b16 %v218
        %v465 = vunpack.c.l.b16 %v219
        %v466 = vunpack.c.l.b16 %v220
        %v467 = vpack.c.b16 %v460, %v459
        %v468 = vpack.c.b16 %v462, %v461
        %v469 = vpack.c.b16 %v464, %v463
        %v470 = vpack.c.b16 %v466, %v465
        %475 = vmatprep.subr.bf16.mxu0 0
        %476 = vmatpush1.bf16.msra.mxu0 %v467
        %477 = vmatprep.subr.bf16.mxu0 0
        %478 = vmatpush1.bf16.msra.mxu0 %v468
        %479 = vmatprep.subr.bf16.mxu0 0
        %480 = vmatpush1.bf16.msra.mxu0 %v469
        %481 = vmatprep.subr.bf16.mxu0 0
        %482 = vmatpush1.bf16.msra.mxu0 %v470
        %483 = vmatprep.subr.bf16.mxu0 0
        %484 = vmatpush1.bf16.msra.mxu0 0
        %485 = vmatprep.subr.bf16.mxu0 0
        %486 = vmatpush1.bf16.msra.mxu0 0
        %487 = vmatprep.subr.bf16.mxu0 0
        %488 = vmatpush1.bf16.msra.mxu0 0
        %489 = vmatprep.subr.bf16.mxu0 0
        %490 = vmatpush1.bf16.msra.mxu0 0
        %491 = vmatprep.subr.bf16.mxu0 0
        %492 = vmatpush1.bf16.msra.mxu0 0
        %493 = vmatprep.subr.bf16.mxu0 0
        %494 = vmatpush1.bf16.msra.mxu0 0
        %495 = vmatprep.subr.bf16.mxu0 0
        %496 = vmatpush1.bf16.msra.mxu0 0
        %497 = vmatprep.subr.bf16.mxu0 0
        %498 = vmatpush1.bf16.msra.mxu0 0
        %499 = vmatprep.subr.bf16.mxu0 0
        %500 = vmatpush1.bf16.msra.mxu0 0
        %501 = vmatprep.subr.bf16.mxu0 0
        %502 = vmatpush1.bf16.msra.mxu0 0
        %503 = vmatprep.subr.bf16.mxu0 0
        %504 = vmatpush1.bf16.msra.mxu0 0
        %505 = vmatprep.subr.bf16.mxu0 0
        %506 = vmatpush1.bf16.msra.mxu0 0
        %507 = vmatprep.mubr.bf16.mxu0 0
        %508 = vmatmul.mubr.bf16.gmra.mrb[0].mxu0 %v296
        %v509 = vpop.f32.mrb[0].mxu0
        %v510 = vadd.f32 %v449, %v509
        %v511 = vpop.f32.mrb[0].mxu0
        %v512 = vpop.f32.mrb[0].mxu0
        %v513 = vadd.f32 %v448, %v512
        %v514 = vpop.f32.mrb[0].mxu0
        %515 = vmatprep.mubr.bf16.mxu0 0
        %516 = vmatmul.mubr.bf16.gmra.mrb[0].mxu0 %v299
        %v517 = vpop.f32.mrb[0].mxu0
        %v518 = vadd.f32 %v447, %v517
        %v519 = vpop.f32.mrb[0].mxu0
        %v520 = vpop.f32.mrb[0].mxu0
        %v521 = vadd.f32 %v446, %v520
        %v522 = vpop.f32.mrb[0].mxu0
        %523 = vmatprep.mubr.bf16.mxu0 0
        %524 = vmatmul.mubr.bf16.gmra.mrb[0].mxu0 %v302
        %v525 = vpop.f32.mrb[0].mxu0
        %v526 = vadd.f32 %v445, %v525
        %v527 = vpop.f32.mrb[0].mxu0
        %v528 = vpop.f32.mrb[0].mxu0
        %v529 = vadd.f32 %v444, %v528
        %v530 = vpop.f32.mrb[0].mxu0
        %531 = vmatprep.mubr.bf16.mxu0 0
        %532 = vmatmul.mubr.bf16.gmra.mrb[0].mxu0 %v305
        %v533 = vpop.f32.mrb[0].mxu0
        %v534 = vadd.f32 %v443, %v533
        %v535 = vpop.f32.mrb[0].mxu0
        %v536 = vpop.f32.mrb[0].mxu0
        %v537 = vadd.f32 %v442, %v536
        %v538 = vpop.f32.mrb[0].mxu0
        %539 = vmatprep.mubr.bf16.mxu0 0
        %540 = vmatmul.mubr.bf16.gmra.mrb[0].mxu0 %v308
        %v541 = vpop.f32.mrb[0].mxu0
        %v542 = vadd.f32 %v441, %v541
        %v543 = vpop.f32.mrb[0].mxu0
        %v544 = vpop.f32.mrb[0].mxu0
        %v545 = vadd.f32 %v440, %v544
        %v546 = vpop.f32.mrb[0].mxu0
        %547 = vmatprep.mubr.bf16.mxu0 0
        %548 = vmatmul.mubr.bf16.gmra.mrb[0].mxu0 %v311
        %v549 = vpop.f32.mrb[0].mxu0
        %v550 = vadd.f32 %v439, %v549
        %v551 = vpop.f32.mrb[0].mxu0
        %v552 = vpop.f32.mrb[0].mxu0
        %v553 = vadd.f32 %v438, %v552
        %v554 = vpop.f32.mrb[0].mxu0
        %555 = vmatprep.mubr.bf16.mxu0 0
        %556 = vmatmul.mubr.bf16.gmra.mrb[0].mxu0 %v314
        %v557 = vpop.f32.mrb[0].mxu0
        %v558 = vadd.f32 %v437, %v557
        %v559 = vpop.f32.mrb[0].mxu0
        %v560 = vpop.f32.mrb[0].mxu0
        %v561 = vadd.f32 %v436, %v560
        %v562 = vpop.f32.mrb[0].mxu0
        %563 = vmatprep.mubr.bf16.mxu0 0
        %564 = vmatmul.mubr.bf16.gmra.mrb[0].mxu0 %v317
        %v565 = vpop.f32.mrb[0].mxu0
        %v566 = vadd.f32 %v435, %v565
        %v567 = vpop.f32.mrb[0].mxu0
        %v568 = vpop.f32.mrb[0].mxu0
        %v569 = vadd.f32 %v450, %v568
        %v570 = vpop.f32.mrb[0].mxu0
        %571 = vdwg.mxu0
        %s572 = scalar_lea.vmem %s1, 64
        %v573 = vld [vmem:[%s572] sm:$0xf]
        %v574 = vld [vmem:[%s572 + $0x4] sm:$0xf]
        %v575 = vld [vmem:[%s572 + $0x8] sm:$0xf]
        %v576 = vld [vmem:[%s572 + $0xc] sm:$0xf]
        %v577 = vld [vmem:[%s572 + $0x10] sm:$0xf]
        %v578 = vld [vmem:[%s572 + $0x14] sm:$0xf]
        %v579 = vld [vmem:[%s572 + $0x18] sm:$0xf]
        %v580 = vld [vmem:[%s572 + $0x1c] sm:$0xf]
        %v589 = vunpack.c.l.b16 %v573
        %v590 = vunpack.c.l.b16 %v574
        %v591 = vunpack.c.l.b16 %v575
        %v592 = vunpack.c.l.b16 %v576
        %v593 = vunpack.c.l.b16 %v577
        %v594 = vunpack.c.l.b16 %v578
        %v595 = vunpack.c.l.b16 %v579
        %v596 = vunpack.c.l.b16 %v580
        %v597 = vpack.c.b16 %v590, %v589
        %v598 = vpack.c.b16 %v592, %v591
        %v599 = vpack.c.b16 %v594, %v593
        %v600 = vpack.c.b16 %v596, %v595
        %605 = vmatprep.subr.bf16.mxu0 0
        %606 = vmatpush1.bf16.msra.mxu0 %v597
        %607 = vmatprep.subr.bf16.mxu0 0
        %608 = vmatpush1.bf16.msra.mxu0 %v598
        %609 = vmatprep.subr.bf16.mxu0 0
        %610 = vmatpush1.bf16.msra.mxu0 %v599
        %611 = vmatprep.subr.bf16.mxu0 0
        %612 = vmatpush1.bf16.msra.mxu0 %v600
        %613 = vmatprep.subr.bf16.mxu0 0
        %614 = vmatpush1.bf16.msra.mxu0 0
        %615 = vmatprep.subr.bf16.mxu0 0
        %616 = vmatpush1.bf16.msra.mxu0 0
        %617 = vmatprep.subr.bf16.mxu0 0
        %618 = vmatpush1.bf16.msra.mxu0 0
        %619 = vmatprep.subr.bf16.mxu0 0
        %620 = vmatpush1.bf16.msra.mxu0 0
        %621 = vmatprep.subr.bf16.mxu0 0
        %622 = vmatpush1.bf16.msra.mxu0 0
        %623 = vmatprep.subr.bf16.mxu0 0
        %624 = vmatpush1.bf16.msra.mxu0 0
        %625 = vmatprep.subr.bf16.mxu0 0
        %626 = vmatpush1.bf16.msra.mxu0 0
        %627 = vmatprep.subr.bf16.mxu0 0
        %628 = vmatpush1.bf16.msra.mxu0 0
        %629 = vmatprep.subr.bf16.mxu0 0
        %630 = vmatpush1.bf16.msra.mxu0 0
        %631 = vmatprep.subr.bf16.mxu0 0
        %632 = vmatpush1.bf16.msra.mxu0 0
        %633 = vmatprep.subr.bf16.mxu0 0
        %634 = vmatpush1.bf16.msra.mxu0 0
        %635 = vmatprep.subr.bf16.mxu0 0
        %636 = vmatpush1.bf16.msra.mxu0 0
        %637 = vmatprep.mubr.bf16.mxu0 0
        %638 = vmatmul.mubr.bf16.gmra.mrb[0].mxu0 %v296
        %v639 = vpop.f32.mrb[0].mxu0
        %v640 = vadd.f32 0.0, %v639
        %v641 = vpop.f32.mrb[0].mxu0
        %v642 = vpop.f32.mrb[0].mxu0
        %v643 = vadd.f32 0.0, %v642
        %v644 = vpop.f32.mrb[0].mxu0
        %645 = vmatprep.mubr.bf16.mxu0 0
        %646 = vmatmul.mubr.bf16.gmra.mrb[0].mxu0 %v299
        %v647 = vpop.f32.mrb[0].mxu0
        %v648 = vadd.f32 0.0, %v647
        %v649 = vpop.f32.mrb[0].mxu0
        %v650 = vpop.f32.mrb[0].mxu0
        %v651 = vadd.f32 0.0, %v650
        %v652 = vpop.f32.mrb[0].mxu0
        %653 = vmatprep.mubr.bf16.mxu0 0
        %654 = vmatmul.mubr.bf16.gmra.mrb[0].mxu0 %v302
        %v655 = vpop.f32.mrb[0].mxu0
        %v656 = vadd.f32 0.0, %v655
        %v657 = vpop.f32.mrb[0].mxu0
        %v658 = vpop.f32.mrb[0].mxu0
        %v659 = vadd.f32 0.0, %v658
        %v660 = vpop.f32.mrb[0].mxu0
        %661 = vmatprep.mubr.bf16.mxu0 0
        %662 = vmatmul.mubr.bf16.gmra.mrb[0].mxu0 %v305
        %v663 = vpop.f32.mrb[0].mxu0
        %v664 = vadd.f32 0.0, %v663
        %v665 = vpop.f32.mrb[0].mxu0
        %v666 = vpop.f32.mrb[0].mxu0
        %v667 = vadd.f32 0.0, %v666
        %v668 = vpop.f32.mrb[0].mxu0
        %669 = vmatprep.mubr.bf16.mxu0 0
        %670 = vmatmul.mubr.bf16.gmra.mrb[0].mxu0 %v308
        %v671 = vpop.f32.mrb[0].mxu0
        %v672 = vadd.f32 0.0, %v671
        %v673 = vpop.f32.mrb[0].mxu0
        %v674 = vpop.f32.mrb[0].mxu0
        %v675 = vadd.f32 0.0, %v674
        %v676 = vpop.f32.mrb[0].mxu0
        %677 = vmatprep.mubr.bf16.mxu0 0
        %678 = vmatmul.mubr.bf16.gmra.mrb[0].mxu0 %v311
        %v679 = vpop.f32.mrb[0].mxu0
        %v680 = vadd.f32 0.0, %v679
        %v681 = vpop.f32.mrb[0].mxu0
        %v682 = vpop.f32.mrb[0].mxu0
        %v683 = vadd.f32 0.0, %v682
        %v684 = vpop.f32.mrb[0].mxu0
        %685 = vmatprep.mubr.bf16.mxu0 0
        %686 = vmatmul.mubr.bf16.gmra.mrb[0].mxu0 %v314
        %v687 = vpop.f32.mrb[0].mxu0
        %v688 = vadd.f32 0.0, %v687
        %v689 = vpop.f32.mrb[0].mxu0
        %v690 = vpop.f32.mrb[0].mxu0
        %v691 = vadd.f32 0.0, %v690
        %v692 = vpop.f32.mrb[0].mxu0
        %693 = vmatprep.mubr.bf16.mxu0 0
        %694 = vmatmul.mubr.bf16.gmra.mrb[0].mxu0 %v317
        %v695 = vpop.f32.mrb[0].mxu0
        %v696 = vadd.f32 0.0, %v695
        %v697 = vpop.f32.mrb[0].mxu0
        %v698 = vpop.f32.mrb[0].mxu0
        %v699 = vadd.f32 0.0, %v698
        %v700 = vpop.f32.mrb[0].mxu0
        %701 = vdwg.mxu0
        %v702 = vrot.slane %v640, 2
        %v703 = vrot.slane %v643, 2
        %v704 = vrot.slane %v648, 2
        %v705 = vrot.slane %v651, 2
        %v706 = vrot.slane %v656, 2
        %v707 = vrot.slane %v659, 2
        %v708 = vrot.slane %v664, 2
        %v709 = vrot.slane %v667, 2
        %v710 = vrot.slane %v672, 2
        %v711 = vrot.slane %v675, 2
        %v712 = vrot.slane %v680, 2
        %v713 = vrot.slane %v683, 2
        %v714 = vrot.slane %v688, 2
        %v715 = vrot.slane %v691, 2
        %v716 = vrot.slane %v696, 2
        %v717 = vrot.slane %v699, 2
        %vm718 = vcmp.lt.s32.totalorder %v433, 6
        %v719 = vsel %vm718, %v716, %v717
        %v720 = vsel %vm718, %v715, %v716
        %v721 = vsel %vm718, %v714, %v715
        %v722 = vsel %vm718, %v713, %v714
        %v723 = vsel %vm718, %v712, %v713
        %v724 = vsel %vm718, %v711, %v712
        %v725 = vsel %vm718, %v710, %v711
        %v726 = vsel %vm718, %v709, %v710
        %v727 = vsel %vm718, %v708, %v709
        %v728 = vsel %vm718, %v707, %v708
        %v729 = vsel %vm718, %v706, %v707
        %v730 = vsel %vm718, %v705, %v706
        %v731 = vsel %vm718, %v704, %v705
        %v732 = vsel %vm718, %v703, %v704
        %v733 = vsel %vm718, %v702, %v703
        %v734 = vsel %vm718, %v717, %v702
        %v735 = vadd.f32 %v510, %v733
        %v736 = vadd.f32 %v513, %v732
        %v737 = vadd.f32 %v518, %v731
        %v738 = vadd.f32 %v521, %v730
        %v739 = vadd.f32 %v526, %v729
        %v740 = vadd.f32 %v529, %v728
        %v741 = vadd.f32 %v534, %v727
        %v742 = vadd.f32 %v537, %v726
        %v743 = vadd.f32 %v542, %v725
        %v744 = vadd.f32 %v545, %v724
        %v745 = vadd.f32 %v550, %v723
        %v746 = vadd.f32 %v553, %v722
        %v747 = vadd.f32 %v558, %v721
        %v748 = vadd.f32 %v561, %v720
        %v749 = vadd.f32 %v566, %v719
        %v750 = vadd.f32 %v569, %v734
        %751 = vst.msk [vmem:[#allocation2] sm:$0xff] %vm294, %v735
        %752 = vst.msk [vmem:[#allocation2 + $0x8] sm:$0xff] %vm294, %v736
        %753 = vst.msk [vmem:[#allocation2 + $0x10] sm:$0xff] %vm294, %v737
        %754 = vst.msk [vmem:[#allocation2 + $0x18] sm:$0xff] %vm294, %v738
        %755 = vst.msk [vmem:[#allocation2 + $0x20] sm:$0xff] %vm294, %v739
        %756 = vst.msk [vmem:[#allocation2 + $0x28] sm:$0xff] %vm294, %v740
        %757 = vst.msk [vmem:[#allocation2 + $0x30] sm:$0xff] %vm294, %v741
        %758 = vst.msk [vmem:[#allocation2 + $0x38] sm:$0xff] %vm294, %v742
        %759 = vst.msk [vmem:[#allocation2 + $0x40] sm:$0xff] %vm294, %v743
        %760 = vst.msk [vmem:[#allocation2 + $0x48] sm:$0xff] %vm294, %v744
        %761 = vst.msk [vmem:[#allocation2 + $0x50] sm:$0xff] %vm294, %v745
        %762 = vst.msk [vmem:[#allocation2 + $0x58] sm:$0xff] %vm294, %v746
        %763 = vst.msk [vmem:[#allocation2 + $0x60] sm:$0xff] %vm294, %v747
        %764 = vst.msk [vmem:[#allocation2 + $0x68] sm:$0xff] %vm294, %v748
        %765 = vst.msk [vmem:[#allocation2 + $0x70] sm:$0xff] %vm294, %v749
        %766 = vst.msk [vmem:[#allocation2 + $0x78] sm:$0xff] %vm294, %v750
        %v767 = vld [vmem:[%s195 + $0x8] sm:$0xf]
        %v768 = vld [vmem:[%s195 + $0xc] sm:$0xf]
        %v769 = vld [vmem:[%s195 + $0x10] sm:$0xf]
        %v770 = vld [vmem:[%s195 + $0x14] sm:$0xf]
        %v771 = vld [vmem:[%s195 + $0x18] sm:$0xf]
        %v772 = vld [vmem:[%s195 + $0x1c] sm:$0xf]
        %v773 = vld [vmem:[%s195 + $0x20] sm:$0xf]
        %v774 = vld [vmem:[%s195 + $0x24] sm:$0xf]
        %v775 = vld [vmem:[%s195 + $0x28] sm:$0xf]
        %v776 = vld [vmem:[%s195 + $0x2c] sm:$0xf]
        %v777 = vld [vmem:[%s195 + $0x30] sm:$0xf]
        %v778 = vld [vmem:[%s195 + $0x34] sm:$0xf]
        %v779 = vld [vmem:[%s195 + $0x38] sm:$0xf]
        %v780 = vld [vmem:[%s195 + $0x3c] sm:$0xf]
        %v781 = vld [vmem:[%s195 + $0x40] sm:$0xf]
        %v782 = vld [vmem:[%s195 + $0x44] sm:$0xf]
        %s783 = scalar_lea.vmem %s1, 96
        %v784 = vld [vmem:[%s783] sm:$0xf]
        %v785 = vld [vmem:[%s783 + $0x4] sm:$0xf]
        %v786 = vld [vmem:[%s783 + $0x8] sm:$0xf]
        %v787 = vld [vmem:[%s783 + $0xc] sm:$0xf]
        %v788 = vld [vmem:[%s783 + $0x10] sm:$0xf]
        %v789 = vld [vmem:[%s783 + $0x14] sm:$0xf]
        %v790 = vld [vmem:[%s783 + $0x18] sm:$0xf]
        %v791 = vld [vmem:[%s783 + $0x1c] sm:$0xf]
        %s792 = scalar_lea.vmem %s1, 128
        %v793 = vld [vmem:[%s792] sm:$0xf]
        %v794 = vld [vmem:[%s792 + $0x4] sm:$0xf]
        %v795 = vld [vmem:[%s792 + $0x8] sm:$0xf]
        %v796 = vld [vmem:[%s792 + $0xc] sm:$0xf]
        %v797 = vld [vmem:[%s792 + $0x10] sm:$0xf]
        %v798 = vld [vmem:[%s792 + $0x14] sm:$0xf]
        %v799 = vld [vmem:[%s792 + $0x18] sm:$0xf]
        %v800 = vld [vmem:[%s792 + $0x1c] sm:$0xf]
        %v817 = vunpack.c.l.b16 %v767
        %v818 = vunpack.c.l.b16 %v768
        %v819 = vunpack.c.l.b16 %v769
        %v820 = vunpack.c.l.b16 %v770
        %v821 = vunpack.c.l.b16 %v771
        %v822 = vunpack.c.l.b16 %v772
        %v823 = vunpack.c.l.b16 %v773
        %v824 = vunpack.c.l.b16 %v774
        %v825 = vunpack.c.l.b16 %v775
        %v826 = vunpack.c.l.b16 %v776
        %v827 = vunpack.c.l.b16 %v777
        %v828 = vunpack.c.l.b16 %v778
        %v829 = vunpack.c.l.b16 %v779
        %v830 = vunpack.c.l.b16 %v780
        %v831 = vunpack.c.l.b16 %v781
        %v832 = vunpack.c.l.b16 %v782
        %v833 = vpack.c.b16 %v818, %v817
        %v834 = vpack.c.b16 %v820, %v819
        %v835 = vpack.c.b16 %v822, %v821
        %v836 = vpack.c.b16 %v824, %v823
        %v837 = vpack.c.b16 %v826, %v825
        %v838 = vpack.c.b16 %v828, %v827
        %v839 = vpack.c.b16 %v830, %v829
        %v840 = vpack.c.b16 %v832, %v831
        %v849 = vunpack.c.l.b16 %v793
        %v850 = vunpack.c.l.b16 %v794
        %v851 = vunpack.c.l.b16 %v795
        %v852 = vunpack.c.l.b16 %v796
        %v853 = vunpack.c.l.b16 %v797
        %v854 = vunpack.c.l.b16 %v798
        %v855 = vunpack.c.l.b16 %v799
        %v856 = vunpack.c.l.b16 %v800
        %v857 = vpack.c.b16 %v850, %v849
        %v858 = vpack.c.b16 %v852, %v851
        %v859 = vpack.c.b16 %v854, %v853
        %v860 = vpack.c.b16 %v856, %v855
        %v866 = vsel %vm294, %v833, 0
        %v869 = vsel %vm294, %v834, 0
        %v872 = vsel %vm294, %v835, 0
        %v875 = vsel %vm294, %v836, 0
        %v878 = vsel %vm294, %v837, 0
        %v881 = vsel %vm294, %v838, 0
        %v884 = vsel %vm294, %v839, 0
        %v887 = vsel %vm294, %v840, 0
        %889 = vmatprep.subr.bf16.mxu0 0
        %890 = vmatpush1.bf16.msra.mxu0 %v857
        %891 = vmatprep.subr.bf16.mxu0 0
        %892 = vmatpush1.bf16.msra.mxu0 %v858
        %893 = vmatprep.subr.bf16.mxu0 0
        %894 = vmatpush1.bf16.msra.mxu0 %v859
        %895 = vmatprep.subr.bf16.mxu0 0
        %896 = vmatpush1.bf16.msra.mxu0 %v860
        %897 = vmatprep.subr.bf16.mxu0 0
        %898 = vmatpush1.bf16.msra.mxu0 0
        %899 = vmatprep.subr.bf16.mxu0 0
        %900 = vmatpush1.bf16.msra.mxu0 0
        %901 = vmatprep.subr.bf16.mxu0 0
        %902 = vmatpush1.bf16.msra.mxu0 0
        %903 = vmatprep.subr.bf16.mxu0 0
        %904 = vmatpush1.bf16.msra.mxu0 0
        %905 = vmatprep.subr.bf16.mxu0 0
        %906 = vmatpush1.bf16.msra.mxu0 0
        %907 = vmatprep.subr.bf16.mxu0 0
        %908 = vmatpush1.bf16.msra.mxu0 0
        %909 = vmatprep.subr.bf16.mxu0 0
        %910 = vmatpush1.bf16.msra.mxu0 0
        %911 = vmatprep.subr.bf16.mxu0 0
        %912 = vmatpush1.bf16.msra.mxu0 0
        %913 = vmatprep.subr.bf16.mxu0 0
        %914 = vmatpush1.bf16.msra.mxu0 0
        %915 = vmatprep.subr.bf16.mxu0 0
        %916 = vmatpush1.bf16.msra.mxu0 0
        %917 = vmatprep.subr.bf16.mxu0 0
        %918 = vmatpush1.bf16.msra.mxu0 0
        %919 = vmatprep.subr.bf16.mxu0 0
        %920 = vmatpush1.bf16.msra.mxu0 0
        %921 = vmatprep.mubr.bf16.mxu0 0
        %922 = vmatmul.mubr.bf16.gmra.mrb[0].mxu0 %v866
        %v923 = vpop.f32.mrb[0].mxu0
        %v924 = vadd.f32 0.0, %v923
        %v925 = vpop.f32.mrb[0].mxu0
        %v926 = vpop.f32.mrb[0].mxu0
        %v927 = vadd.f32 0.0, %v926
        %v928 = vpop.f32.mrb[0].mxu0
        %929 = vmatprep.mubr.bf16.mxu0 0
        %930 = vmatmul.mubr.bf16.gmra.mrb[0].mxu0 %v869
        %v931 = vpop.f32.mrb[0].mxu0
        %v932 = vadd.f32 0.0, %v931
        %v933 = vpop.f32.mrb[0].mxu0
        %v934 = vpop.f32.mrb[0].mxu0
        %v935 = vadd.f32 0.0, %v934
        %v936 = vpop.f32.mrb[0].mxu0
        %937 = vmatprep.mubr.bf16.mxu0 0
        %938 = vmatmul.mubr.bf16.gmra.mrb[0].mxu0 %v872
        %v939 = vpop.f32.mrb[0].mxu0
        %v940 = vadd.f32 0.0, %v939
        %v941 = vpop.f32.mrb[0].mxu0
        %v942 = vpop.f32.mrb[0].mxu0
        %v943 = vadd.f32 0.0, %v942
        %v944 = vpop.f32.mrb[0].mxu0
        %945 = vmatprep.mubr.bf16.mxu0 0
        %946 = vmatmul.mubr.bf16.gmra.mrb[0].mxu0 %v875
        %v947 = vpop.f32.mrb[0].mxu0
        %v948 = vadd.f32 0.0, %v947
        %v949 = vpop.f32.mrb[0].mxu0
        %v950 = vpop.f32.mrb[0].mxu0
        %v951 = vadd.f32 0.0, %v950
        %v952 = vpop.f32.mrb[0].mxu0
        %953 = vmatprep.mubr.bf16.mxu0 0
        %954 = vmatmul.mubr.bf16.gmra.mrb[0].mxu0 %v878
        %v955 = vpop.f32.mrb[0].mxu0
        %v956 = vadd.f32 0.0, %v955
        %v957 = vpop.f32.mrb[0].mxu0
        %v958 = vpop.f32.mrb[0].mxu0
        %v959 = vadd.f32 0.0, %v958
        %v960 = vpop.f32.mrb[0].mxu0
        %961 = vmatprep.mubr.bf16.mxu0 0
        %962 = vmatmul.mubr.bf16.gmra.mrb[0].mxu0 %v881
        %v963 = vpop.f32.mrb[0].mxu0
        %v964 = vadd.f32 0.0, %v963
        %v965 = vpop.f32.mrb[0].mxu0
        %v966 = vpop.f32.mrb[0].mxu0
        %v967 = vadd.f32 0.0, %v966
        %v968 = vpop.f32.mrb[0].mxu0
        %969 = vmatprep.mubr.bf16.mxu0 0
        %970 = vmatmul.mubr.bf16.gmra.mrb[0].mxu0 %v884
        %v971 = vpop.f32.mrb[0].mxu0
        %v972 = vadd.f32 0.0, %v971
        %v973 = vpop.f32.mrb[0].mxu0
        %v974 = vpop.f32.mrb[0].mxu0
        %v975 = vadd.f32 0.0, %v974
        %v976 = vpop.f32.mrb[0].mxu0
        %977 = vmatprep.mubr.bf16.mxu0 0
        %978 = vmatmul.mubr.bf16.gmra.mrb[0].mxu0 %v887
        %v979 = vpop.f32.mrb[0].mxu0
        %v980 = vadd.f32 0.0, %v979
        %v981 = vpop.f32.mrb[0].mxu0
        %v982 = vpop.f32.mrb[0].mxu0
        %v983 = vadd.f32 0.0, %v982
        %v984 = vpop.f32.mrb[0].mxu0
        %985 = vdwg.mxu0
        %v986 = vrot.slane %v924, 1
        %v987 = vrot.slane %v927, 1
        %v988 = vrot.slane %v932, 1
        %v989 = vrot.slane %v935, 1
        %v990 = vrot.slane %v940, 1
        %v991 = vrot.slane %v943, 1
        %v992 = vrot.slane %v948, 1
        %v993 = vrot.slane %v951, 1
        %v994 = vrot.slane %v956, 1
        %v995 = vrot.slane %v959, 1
        %v996 = vrot.slane %v964, 1
        %v997 = vrot.slane %v967, 1
        %v998 = vrot.slane %v972, 1
        %v999 = vrot.slane %v975, 1
        %v1000 = vrot.slane %v980, 1
        %v1001 = vrot.slane %v983, 1
        %v1002 = vsel %vm434, %v1000, %v1001
        %v1003 = vsel %vm434, %v999, %v1000
        %v1004 = vsel %vm434, %v998, %v999
        %v1005 = vsel %vm434, %v997, %v998
        %v1006 = vsel %vm434, %v996, %v997
        %v1007 = vsel %vm434, %v995, %v996
        %v1008 = vsel %vm434, %v994, %v995
        %v1009 = vsel %vm434, %v993, %v994
        %v1010 = vsel %vm434, %v992, %v993
        %v1011 = vsel %vm434, %v991, %v992
        %v1012 = vsel %vm434, %v990, %v991
        %v1013 = vsel %vm434, %v989, %v990
        %v1014 = vsel %vm434, %v988, %v989
        %v1015 = vsel %vm434, %v987, %v988
        %v1016 = vsel %vm434, %v986, %v987
        %v1017 = vsel %vm434, %v1001, %v986
        %v1026 = vunpack.c.l.b16 %v784
        %v1027 = vunpack.c.l.b16 %v785
        %v1028 = vunpack.c.l.b16 %v786
        %v1029 = vunpack.c.l.b16 %v787
        %v1030 = vunpack.c.l.b16 %v788
        %v1031 = vunpack.c.l.b16 %v789
        %v1032 = vunpack.c.l.b16 %v790
        %v1033 = vunpack.c.l.b16 %v791
        %v1034 = vpack.c.b16 %v1027, %v1026
        %v1035 = vpack.c.b16 %v1029, %v1028
        %v1036 = vpack.c.b16 %v1031, %v1030
        %v1037 = vpack.c.b16 %v1033, %v1032
        %1042 = vmatprep.subr.bf16.mxu0 0
        %1043 = vmatpush1.bf16.msra.mxu0 %v1034
        %1044 = vmatprep.subr.bf16.mxu0 0
        %1045 = vmatpush1.bf16.msra.mxu0 %v1035
        %1046 = vmatprep.subr.bf16.mxu0 0
        %1047 = vmatpush1.bf16.msra.mxu0 %v1036
        %1048 = vmatprep.subr.bf16.mxu0 0
        %1049 = vmatpush1.bf16.msra.mxu0 %v1037
        %1050 = vmatprep.subr.bf16.mxu0 0
        %1051 = vmatpush1.bf16.msra.mxu0 0
        %1052 = vmatprep.subr.bf16.mxu0 0
        %1053 = vmatpush1.bf16.msra.mxu0 0
        %1054 = vmatprep.subr.bf16.mxu0 0
        %1055 = vmatpush1.bf16.msra.mxu0 0
        %1056 = vmatprep.subr.bf16.mxu0 0
        %1057 = vmatpush1.bf16.msra.mxu0 0
        %1058 = vmatprep.subr.bf16.mxu0 0
        %1059 = vmatpush1.bf16.msra.mxu0 0
        %1060 = vmatprep.subr.bf16.mxu0 0
        %1061 = vmatpush1.bf16.msra.mxu0 0
        %1062 = vmatprep.subr.bf16.mxu0 0
        %1063 = vmatpush1.bf16.msra.mxu0 0
        %1064 = vmatprep.subr.bf16.mxu0 0
        %1065 = vmatpush1.bf16.msra.mxu0 0
        %1066 = vmatprep.subr.bf16.mxu0 0
        %1067 = vmatpush1.bf16.msra.mxu0 0
        %1068 = vmatprep.subr.bf16.mxu0 0
        %1069 = vmatpush1.bf16.msra.mxu0 0
        %1070 = vmatprep.subr.bf16.mxu0 0
        %1071 = vmatpush1.bf16.msra.mxu0 0
        %1072 = vmatprep.subr.bf16.mxu0 0
        %1073 = vmatpush1.bf16.msra.mxu0 0
        %1074 = vmatprep.mubr.bf16.mxu0 0
        %1075 = vmatmul.mubr.bf16.gmra.mrb[0].mxu0 %v866
        %v1076 = vpop.f32.mrb[0].mxu0
        %v1077 = vadd.f32 %v1016, %v1076
        %v1078 = vpop.f32.mrb[0].mxu0
        %v1079 = vpop.f32.mrb[0].mxu0
        %v1080 = vadd.f32 %v1015, %v1079
        %v1081 = vpop.f32.mrb[0].mxu0
        %1082 = vmatprep.mubr.bf16.mxu0 0
        %1083 = vmatmul.mubr.bf16.gmra.mrb[0].mxu0 %v869
        %v1084 = vpop.f32.mrb[0].mxu0
        %v1085 = vadd.f32 %v1014, %v1084
        %v1086 = vpop.f32.mrb[0].mxu0
        %v1087 = vpop.f32.mrb[0].mxu0
        %v1088 = vadd.f32 %v1013, %v1087
        %v1089 = vpop.f32.mrb[0].mxu0
        %1090 = vmatprep.mubr.bf16.mxu0 0
        %1091 = vmatmul.mubr.bf16.gmra.mrb[0].mxu0 %v872
        %v1092 = vpop.f32.mrb[0].mxu0
        %v1093 = vadd.f32 %v1012, %v1092
        %v1094 = vpop.f32.mrb[0].mxu0
        %v1095 = vpop.f32.mrb[0].mxu0
        %v1096 = vadd.f32 %v1011, %v1095
        %v1097 = vpop.f32.mrb[0].mxu0
        %1098 = vmatprep.mubr.bf16.mxu0 0
        %1099 = vmatmul.mubr.bf16.gmra.mrb[0].mxu0 %v875
        %v1100 = vpop.f32.mrb[0].mxu0
        %v1101 = vadd.f32 %v1010, %v1100
        %v1102 = vpop.f32.mrb[0].mxu0
        %v1103 = vpop.f32.mrb[0].mxu0
        %v1104 = vadd.f32 %v1009, %v1103
        %v1105 = vpop.f32.mrb[0].mxu0
        %1106 = vmatprep.mubr.bf16.mxu0 0
        %1107 = vmatmul.mubr.bf16.gmra.mrb[0].mxu0 %v878
        %v1108 = vpop.f32.mrb[0].mxu0
        %v1109 = vadd.f32 %v1008, %v1108
        %v1110 = vpop.f32.mrb[0].mxu0
        %v1111 = vpop.f32.mrb[0].mxu0
        %v1112 = vadd.f32 %v1007, %v1111
        %v1113 = vpop.f32.mrb[0].mxu0
        %1114 = vmatprep.mubr.bf16.mxu0 0
        %1115 = vmatmul.mubr.bf16.gmra.mrb[0].mxu0 %v881
        %v1116 = vpop.f32.mrb[0].mxu0
        %v1117 = vadd.f32 %v1006, %v1116
        %v1118 = vpop.f32.mrb[0].mxu0
        %v1119 = vpop.f32.mrb[0].mxu0
        %v1120 = vadd.f32 %v1005, %v1119
        %v1121 = vpop.f32.mrb[0].mxu0
        %1122 = vmatprep.mubr.bf16.mxu0 0
        %1123 = vmatmul.mubr.bf16.gmra.mrb[0].mxu0 %v884
        %v1124 = vpop.f32.mrb[0].mxu0
        %v1125 = vadd.f32 %v1004, %v1124
        %v1126 = vpop.f32.mrb[0].mxu0
        %v1127 = vpop.f32.mrb[0].mxu0
        %v1128 = vadd.f32 %v1003, %v1127
        %v1129 = vpop.f32.mrb[0].mxu0
        %1130 = vmatprep.mubr.bf16.mxu0 0
        %1131 = vmatmul.mubr.bf16.gmra.mrb[0].mxu0 %v887
        %v1132 = vpop.f32.mrb[0].mxu0
        %v1133 = vadd.f32 %v1002, %v1132
        %v1134 = vpop.f32.mrb[0].mxu0
        %v1135 = vpop.f32.mrb[0].mxu0
        %v1136 = vadd.f32 %v1017, %v1135
        %v1137 = vpop.f32.mrb[0].mxu0
        %1138 = vdwg.mxu0
        %s1139 = scalar_lea.vmem %s1, 160
        %v1140 = vld [vmem:[%s1139] sm:$0xf]
        %v1141 = vld [vmem:[%s1139 + $0x4] sm:$0xf]
        %v1142 = vld [vmem:[%s1139 + $0x8] sm:$0xf]
        %v1143 = vld [vmem:[%s1139 + $0xc] sm:$0xf]
        %v1144 = vld [vmem:[%s1139 + $0x10] sm:$0xf]
        %v1145 = vld [vmem:[%s1139 + $0x14] sm:$0xf]
        %v1146 = vld [vmem:[%s1139 + $0x18] sm:$0xf]
        %v1147 = vld [vmem:[%s1139 + $0x1c] sm:$0xf]
        %v1156 = vunpack.c.l.b16 %v1140
        %v1157 = vunpack.c.l.b16 %v1141
        %v1158 = vunpack.c.l.b16 %v1142
        %v1159 = vunpack.c.l.b16 %v1143
        %v1160 = vunpack.c.l.b16 %v1144
        %v1161 = vunpack.c.l.b16 %v1145
        %v1162 = vunpack.c.l.b16 %v1146
        %v1163 = vunpack.c.l.b16 %v1147
        %v1164 = vpack.c.b16 %v1157, %v1156
        %v1165 = vpack.c.b16 %v1159, %v1158
        %v1166 = vpack.c.b16 %v1161, %v1160
        %v1167 = vpack.c.b16 %v1163, %v1162
        %1172 = vmatprep.subr.bf16.mxu0 0
        %1173 = vmatpush1.bf16.msra.mxu0 %v1164
        %1174 = vmatprep.subr.bf16.mxu0 0
        %1175 = vmatpush1.bf16.msra.mxu0 %v1165
        %1176 = vmatprep.subr.bf16.mxu0 0
        %1177 = vmatpush1.bf16.msra.mxu0 %v1166
        %1178 = vmatprep.subr.bf16.mxu0 0
        %1179 = vmatpush1.bf16.msra.mxu0 %v1167
        %1180 = vmatprep.subr.bf16.mxu0 0
        %1181 = vmatpush1.bf16.msra.mxu0 0
        %1182 = vmatprep.subr.bf16.mxu0 0
        %1183 = vmatpush1.bf16.msra.mxu0 0
        %1184 = vmatprep.subr.bf16.mxu0 0
        %1185 = vmatpush1.bf16.msra.mxu0 0
        %1186 = vmatprep.subr.bf16.mxu0 0
        %1187 = vmatpush1.bf16.msra.mxu0 0
        %1188 = vmatprep.subr.bf16.mxu0 0
        %1189 = vmatpush1.bf16.msra.mxu0 0
        %1190 = vmatprep.subr.bf16.mxu0 0
        %1191 = vmatpush1.bf16.msra.mxu0 0
        %1192 = vmatprep.subr.bf16.mxu0 0
        %1193 = vmatpush1.bf16.msra.mxu0 0
        %1194 = vmatprep.subr.bf16.mxu0 0
        %1195 = vmatpush1.bf16.msra.mxu0 0
        %1196 = vmatprep.subr.bf16.mxu0 0
        %1197 = vmatpush1.bf16.msra.mxu0 0
        %1198 = vmatprep.subr.bf16.mxu0 0
        %1199 = vmatpush1.bf16.msra.mxu0 0
        %1200 = vmatprep.subr.bf16.mxu0 0
        %1201 = vmatpush1.bf16.msra.mxu0 0
        %1202 = vmatprep.subr.bf16.mxu0 0
        %1203 = vmatpush1.bf16.msra.mxu0 0
        %1204 = vmatprep.mubr.bf16.mxu0 0
        %1205 = vmatmul.mubr.bf16.gmra.mrb[0].mxu0 %v866
        %v1206 = vpop.f32.mrb[0].mxu0
        %v1207 = vadd.f32 0.0, %v1206
        %v1208 = vpop.f32.mrb[0].mxu0
        %v1209 = vpop.f32.mrb[0].mxu0
        %v1210 = vadd.f32 0.0, %v1209
        %v1211 = vpop.f32.mrb[0].mxu0
        %1212 = vmatprep.mubr.bf16.mxu0 0
        %1213 = vmatmul.mubr.bf16.gmra.mrb[0].mxu0 %v869
        %v1214 = vpop.f32.mrb[0].mxu0
        %v1215 = vadd.f32 0.0, %v1214
        %v1216 = vpop.f32.mrb[0].mxu0
        %v1217 = vpop.f32.mrb[0].mxu0
        %v1218 = vadd.f32 0.0, %v1217
        %v1219 = vpop.f32.mrb[0].mxu0
        %1220 = vmatprep.mubr.bf16.mxu0 0
        %1221 = vmatmul.mubr.bf16.gmra.mrb[0].mxu0 %v872
        %v1222 = vpop.f32.mrb[0].mxu0
        %v1223 = vadd.f32 0.0, %v1222
        %v1224 = vpop.f32.mrb[0].mxu0
        %v1225 = vpop.f32.mrb[0].mxu0
        %v1226 = vadd.f32 0.0, %v1225
        %v1227 = vpop.f32.mrb[0].mxu0
        %1228 = vmatprep.mubr.bf16.mxu0 0
        %1229 = vmatmul.mubr.bf16.gmra.mrb[0].mxu0 %v875
        %v1230 = vpop.f32.mrb[0].mxu0
        %v1231 = vadd.f32 0.0, %v1230
        %v1232 = vpop.f32.mrb[0].mxu0
        %v1233 = vpop.f32.mrb[0].mxu0
        %v1234 = vadd.f32 0.0, %v1233
        %v1235 = vpop.f32.mrb[0].mxu0
        %1236 = vmatprep.mubr.bf16.mxu0 0
        %1237 = vmatmul.mubr.bf16.gmra.mrb[0].mxu0 %v878
        %v1238 = vpop.f32.mrb[0].mxu0
        %v1239 = vadd.f32 0.0, %v1238
        %v1240 = vpop.f32.mrb[0].mxu0
        %v1241 = vpop.f32.mrb[0].mxu0
        %v1242 = vadd.f32 0.0, %v1241
        %v1243 = vpop.f32.mrb[0].mxu0
        %1244 = vmatprep.mubr.bf16.mxu0 0
        %1245 = vmatmul.mubr.bf16.gmra.mrb[0].mxu0 %v881
        %v1246 = vpop.f32.mrb[0].mxu0
        %v1247 = vadd.f32 0.0, %v1246
        %v1248 = vpop.f32.mrb[0].mxu0
        %v1249 = vpop.f32.mrb[0].mxu0
        %v1250 = vadd.f32 0.0, %v1249
        %v1251 = vpop.f32.mrb[0].mxu0
        %1252 = vmatprep.mubr.bf16.mxu0 0
        %1253 = vmatmul.mubr.bf16.gmra.mrb[0].mxu0 %v884
        %v1254 = vpop.f32.mrb[0].mxu0
        %v1255 = vadd.f32 0.0, %v1254
        %v1256 = vpop.f32.mrb[0].mxu0
        %v1257 = vpop.f32.mrb[0].mxu0
        %v1258 = vadd.f32 0.0, %v1257
        %v1259 = vpop.f32.mrb[0].mxu0
        %1260 = vmatprep.mubr.bf16.mxu0 0
        %1261 = vmatmul.mubr.bf16.gmra.mrb[0].mxu0 %v887
        %v1262 = vpop.f32.mrb[0].mxu0
        %v1263 = vadd.f32 0.0, %v1262
        %v1264 = vpop.f32.mrb[0].mxu0
        %v1265 = vpop.f32.mrb[0].mxu0
        %v1266 = vadd.f32 0.0, %v1265
        %v1267 = vpop.f32.mrb[0].mxu0
        %1268 = vdwg.mxu0
        %v1269 = vrot.slane %v1207, 2
        %v1270 = vrot.slane %v1210, 2
        %v1271 = vrot.slane %v1215, 2
        %v1272 = vrot.slane %v1218, 2
        %v1273 = vrot.slane %v1223, 2
        %v1274 = vrot.slane %v1226, 2
        %v1275 = vrot.slane %v1231, 2
        %v1276 = vrot.slane %v1234, 2
        %v1277 = vrot.slane %v1239, 2
        %v1278 = vrot.slane %v1242, 2
        %v1279 = vrot.slane %v1247, 2
        %v1280 = vrot.slane %v1250, 2
        %v1281 = vrot.slane %v1255, 2
        %v1282 = vrot.slane %v1258, 2
        %v1283 = vrot.slane %v1263, 2
        %v1284 = vrot.slane %v1266, 2
        %v1285 = vsel %vm718, %v1283, %v1284
        %v1286 = vsel %vm718, %v1282, %v1283
        %v1287 = vsel %vm718, %v1281, %v1282
        %v1288 = vsel %vm718, %v1280, %v1281
        %v1289 = vsel %vm718, %v1279, %v1280
        %v1290 = vsel %vm718, %v1278, %v1279
        %v1291 = vsel %vm718, %v1277, %v1278
        %v1292 = vsel %vm718, %v1276, %v1277
        %v1293 = vsel %vm718, %v1275, %v1276
        %v1294 = vsel %vm718, %v1274, %v1275
        %v1295 = vsel %vm718, %v1273, %v1274
        %v1296 = vsel %vm718, %v1272, %v1273
        %v1297 = vsel %vm718, %v1271, %v1272
        %v1298 = vsel %vm718, %v1270, %v1271
        %v1299 = vsel %vm718, %v1269, %v1270
        %v1300 = vsel %vm718, %v1284, %v1269
        %v1301 = vadd.f32 %v1077, %v1299
        %v1302 = vadd.f32 %v1080, %v1298
        %v1303 = vadd.f32 %v1085, %v1297
        %v1304 = vadd.f32 %v1088, %v1296
        %v1305 = vadd.f32 %v1093, %v1295
        %v1306 = vadd.f32 %v1096, %v1294
        %v1307 = vadd.f32 %v1101, %v1293
        %v1308 = vadd.f32 %v1104, %v1292
        %v1309 = vadd.f32 %v1109, %v1291
        %v1310 = vadd.f32 %v1112, %v1290
        %v1311 = vadd.f32 %v1117, %v1289
        %v1312 = vadd.f32 %v1120, %v1288
        %v1313 = vadd.f32 %v1125, %v1287
        %v1314 = vadd.f32 %v1128, %v1286
        %v1315 = vadd.f32 %v1133, %v1285
        %v1316 = vadd.f32 %v1136, %v1300
        %v1317 = vld [vmem:[#allocation2] sm:$0xff]
        %v1318 = vld [vmem:[#allocation2 + $0x8] sm:$0xff]
        %v1319 = vld [vmem:[#allocation2 + $0x10] sm:$0xff]
        %v1320 = vld [vmem:[#allocation2 + $0x18] sm:$0xff]
        %v1321 = vld [vmem:[#allocation2 + $0x20] sm:$0xff]
        %v1322 = vld [vmem:[#allocation2 + $0x28] sm:$0xff]
        %v1323 = vld [vmem:[#allocation2 + $0x30] sm:$0xff]
        %v1324 = vld [vmem:[#allocation2 + $0x38] sm:$0xff]
        %v1325 = vld [vmem:[#allocation2 + $0x40] sm:$0xff]
        %v1326 = vld [vmem:[#allocation2 + $0x48] sm:$0xff]
        %v1327 = vld [vmem:[#allocation2 + $0x50] sm:$0xff]
        %v1328 = vld [vmem:[#allocation2 + $0x58] sm:$0xff]
        %v1329 = vld [vmem:[#allocation2 + $0x60] sm:$0xff]
        %v1330 = vld [vmem:[#allocation2 + $0x68] sm:$0xff]
        %v1331 = vld [vmem:[#allocation2 + $0x70] sm:$0xff]
        %v1332 = vld [vmem:[#allocation2 + $0x78] sm:$0xff]
        %v1333 = vadd.f32 %v1317, %v1301
        %v1334 = vadd.f32 %v1318, %v1302
        %v1335 = vadd.f32 %v1319, %v1303
        %v1336 = vadd.f32 %v1320, %v1304
        %v1337 = vadd.f32 %v1321, %v1305
        %v1338 = vadd.f32 %v1322, %v1306
        %v1339 = vadd.f32 %v1323, %v1307
        %v1340 = vadd.f32 %v1324, %v1308
        %v1341 = vadd.f32 %v1325, %v1309
        %v1342 = vadd.f32 %v1326, %v1310
        %v1343 = vadd.f32 %v1327, %v1311
        %v1344 = vadd.f32 %v1328, %v1312
        %v1345 = vadd.f32 %v1329, %v1313
        %v1346 = vadd.f32 %v1330, %v1314
        %v1347 = vadd.f32 %v1331, %v1315
        %v1348 = vadd.f32 %v1332, %v1316
        %1349 = vst.msk [vmem:[#allocation2] sm:$0xff] %vm294, %v1333
        %1350 = vst.msk [vmem:[#allocation2 + $0x8] sm:$0xff] %vm294, %v1334
        %1351 = vst.msk [vmem:[#allocation2 + $0x10] sm:$0xff] %vm294, %v1335
        %1352 = vst.msk [vmem:[#allocation2 + $0x18] sm:$0xff] %vm294, %v1336
        %1353 = vst.msk [vmem:[#allocation2 + $0x20] sm:$0xff] %vm294, %v1337
        %1354 = vst.msk [vmem:[#allocation2 + $0x28] sm:$0xff] %vm294, %v1338
        %1355 = vst.msk [vmem:[#allocation2 + $0x30] sm:$0xff] %vm294, %v1339
        %1356 = vst.msk [vmem:[#allocation2 + $0x38] sm:$0xff] %vm294, %v1340
        %1357 = vst.msk [vmem:[#allocation2 + $0x40] sm:$0xff] %vm294, %v1341
        %1358 = vst.msk [vmem:[#allocation2 + $0x48] sm:$0xff] %vm294, %v1342
        %1359 = vst.msk [vmem:[#allocation2 + $0x50] sm:$0xff] %vm294, %v1343
        %1360 = vst.msk [vmem:[#allocation2 + $0x58] sm:$0xff] %vm294, %v1344
        %1361 = vst.msk [vmem:[#allocation2 + $0x60] sm:$0xff] %vm294, %v1345
        %1362 = vst.msk [vmem:[#allocation2 + $0x68] sm:$0xff] %vm294, %v1346
        %1363 = vst.msk [vmem:[#allocation2 + $0x70] sm:$0xff] %vm294, %v1347
        %1364 = vst.msk [vmem:[#allocation2 + $0x78] sm:$0xff] %vm294, %v1348
        %v1365 = vld [vmem:[%s195 + $0x10] sm:$0xf]
        %v1366 = vld [vmem:[%s195 + $0x14] sm:$0xf]
        %v1367 = vld [vmem:[%s195 + $0x18] sm:$0xf]
        %v1368 = vld [vmem:[%s195 + $0x1c] sm:$0xf]
        %v1369 = vld [vmem:[%s195 + $0x20] sm:$0xf]
        %v1370 = vld [vmem:[%s195 + $0x24] sm:$0xf]
        %v1371 = vld [vmem:[%s195 + $0x28] sm:$0xf]
        %v1372 = vld [vmem:[%s195 + $0x2c] sm:$0xf]
        %v1373 = vld [vmem:[%s195 + $0x30] sm:$0xf]
        %v1374 = vld [vmem:[%s195 + $0x34] sm:$0xf]
        %v1375 = vld [vmem:[%s195 + $0x38] sm:$0xf]
        %v1376 = vld [vmem:[%s195 + $0x3c] sm:$0xf]
        %v1377 = vld [vmem:[%s195 + $0x40] sm:$0xf]
        %v1378 = vld [vmem:[%s195 + $0x44] sm:$0xf]
        %v1379 = vld [vmem:[%s195 + $0x48] sm:$0xf]
        %v1380 = vld [vmem:[%s195 + $0x4c] sm:$0xf]
        %s1381 = scalar_lea.vmem %s1, 192
        %v1382 = vld [vmem:[%s1381] sm:$0xf]
        %v1383 = vld [vmem:[%s1381 + $0x4] sm:$0xf]
        %v1384 = vld [vmem:[%s1381 + $0x8] sm:$0xf]
        %v1385 = vld [vmem:[%s1381 + $0xc] sm:$0xf]
        %v1386 = vld [vmem:[%s1381 + $0x10] sm:$0xf]
        %v1387 = vld [vmem:[%s1381 + $0x14] sm:$0xf]
        %v1388 = vld [vmem:[%s1381 + $0x18] sm:$0xf]
        %v1389 = vld [vmem:[%s1381 + $0x1c] sm:$0xf]
        %s1390 = scalar_lea.vmem %s1, 224
        %v1391 = vld [vmem:[%s1390] sm:$0xf]
        %v1392 = vld [vmem:[%s1390 + $0x4] sm:$0xf]
        %v1393 = vld [vmem:[%s1390 + $0x8] sm:$0xf]
        %v1394 = vld [vmem:[%s1390 + $0xc] sm:$0xf]
        %v1395 = vld [vmem:[%s1390 + $0x10] sm:$0xf]
        %v1396 = vld [vmem:[%s1390 + $0x14] sm:$0xf]
        %v1397 = vld [vmem:[%s1390 + $0x18] sm:$0xf]
        %v1398 = vld [vmem:[%s1390 + $0x1c] sm:$0xf]
        %v1415 = vunpack.c.l.b16 %v1365
        %v1416 = vunpack.c.l.b16 %v1366
        %v1417 = vunpack.c.l.b16 %v1367
        %v1418 = vunpack.c.l.b16 %v1368
        %v1419 = vunpack.c.l.b16 %v1369
        %v1420 = vunpack.c.l.b16 %v1370
        %v1421 = vunpack.c.l.b16 %v1371
        %v1422 = vunpack.c.l.b16 %v1372
        %v1423 = vunpack.c.l.b16 %v1373
        %v1424 = vunpack.c.l.b16 %v1374
        %v1425 = vunpack.c.l.b16 %v1375
        %v1426 = vunpack.c.l.b16 %v1376
        %v1427 = vunpack.c.l.b16 %v1377
        %v1428 = vunpack.c.l.b16 %v1378
        %v1429 = vunpack.c.l.b16 %v1379
        %v1430 = vunpack.c.l.b16 %v1380
        %v1431 = vpack.c.b16 %v1416, %v1415
        %v1432 = vpack.c.b16 %v1418, %v1417
        %v1433 = vpack.c.b16 %v1420, %v1419
        %v1434 = vpack.c.b16 %v1422, %v1421
        %v1435 = vpack.c.b16 %v1424, %v1423
        %v1436 = vpack.c.b16 %v1426, %v1425
        %v1437 = vpack.c.b16 %v1428, %v1427
        %v1438 = vpack.c.b16 %v1430, %v1429
        %v1447 = vunpack.c.l.b16 %v1391
        %v1448 = vunpack.c.l.b16 %v1392
        %v1449 = vunpack.c.l.b16 %v1393
        %v1450 = vunpack.c.l.b16 %v1394
        %v1451 = vunpack.c.l.b16 %v1395
        %v1452 = vunpack.c.l.b16 %v1396
        %v1453 = vunpack.c.l.b16 %v1397
        %v1454 = vunpack.c.l.b16 %v1398
        %v1455 = vpack.c.b16 %v1448, %v1447
        %v1456 = vpack.c.b16 %v1450, %v1449
        %v1457 = vpack.c.b16 %v1452, %v1451
        %v1458 = vpack.c.b16 %v1454, %v1453
        %v1464 = vsel %vm294, %v1431, 0
        %v1467 = vsel %vm294, %v1432, 0
        %v1470 = vsel %vm294, %v1433, 0
        %v1473 = vsel %vm294, %v1434, 0
        %v1476 = vsel %vm294, %v1435, 0
        %v1479 = vsel %vm294, %v1436, 0
        %v1482 = vsel %vm294, %v1437, 0
        %v1485 = vsel %vm294, %v1438, 0
        %1487 = vmatprep.subr.bf16.mxu0 0
        %1488 = vmatpush1.bf16.msra.mxu0 %v1455
        %1489 = vmatprep.subr.bf16.mxu0 0
        %1490 = vmatpush1.bf16.msra.mxu0 %v1456
        %1491 = vmatprep.subr.bf16.mxu0 0
        %1492 = vmatpush1.bf16.msra.mxu0 %v1457
        %1493 = vmatprep.subr.bf16.mxu0 0
        %1494 = vmatpush1.bf16.msra.mxu0 %v1458
        %1495 = vmatprep.subr.bf16.mxu0 0
        %1496 = vmatpush1.bf16.msra.mxu0 0
        %1497 = vmatprep.subr.bf16.mxu0 0
        %1498 = vmatpush1.bf16.msra.mxu0 0
        %1499 = vmatprep.subr.bf16.mxu0 0
        %1500 = vmatpush1.bf16.msra.mxu0 0
        %1501 = vmatprep.subr.bf16.mxu0 0
        %1502 = vmatpush1.bf16.msra.mxu0 0
        %1503 = vmatprep.subr.bf16.mxu0 0
        %1504 = vmatpush1.bf16.msra.mxu0 0
        %1505 = vmatprep.subr.bf16.mxu0 0
        %1506 = vmatpush1.bf16.msra.mxu0 0
        %1507 = vmatprep.subr.bf16.mxu0 0
        %1508 = vmatpush1.bf16.msra.mxu0 0
        %1509 = vmatprep.subr.bf16.mxu0 0
        %1510 = vmatpush1.bf16.msra.mxu0 0
        %1511 = vmatprep.subr.bf16.mxu0 0
        %1512 = vmatpush1.bf16.msra.mxu0 0
        %1513 = vmatprep.subr.bf16.mxu0 0
        %1514 = vmatpush1.bf16.msra.mxu0 0
        %1515 = vmatprep.subr.bf16.mxu0 0
        %1516 = vmatpush1.bf16.msra.mxu0 0
        %1517 = vmatprep.subr.bf16.mxu0 0
        %1518 = vmatpush1.bf16.msra.mxu0 0
        %1519 = vmatprep.mubr.bf16.mxu0 0
        %1520 = vmatmul.mubr.bf16.gmra.mrb[0].mxu0 %v1464
        %v1521 = vpop.f32.mrb[0].mxu0
        %v1522 = vadd.f32 0.0, %v1521
        %v1523 = vpop.f32.mrb[0].mxu0
        %v1524 = vpop.f32.mrb[0].mxu0
        %v1525 = vadd.f32 0.0, %v1524
        %v1526 = vpop.f32.mrb[0].mxu0
        %1527 = vmatprep.mubr.bf16.mxu0 0
        %1528 = vmatmul.mubr.bf16.gmra.mrb[0].mxu0 %v1467
        %v1529 = vpop.f32.mrb[0].mxu0
        %v1530 = vadd.f32 0.0, %v1529
        %v1531 = vpop.f32.mrb[0].mxu0
        %v1532 = vpop.f32.mrb[0].mxu0
        %v1533 = vadd.f32 0.0, %v1532
        %v1534 = vpop.f32.mrb[0].mxu0
        %1535 = vmatprep.mubr.bf16.mxu0 0
        %1536 = vmatmul.mubr.bf16.gmra.mrb[0].mxu0 %v1470
        %v1537 = vpop.f32.mrb[0].mxu0
        %v1538 = vadd.f32 0.0, %v1537
        %v1539 = vpop.f32.mrb[0].mxu0
        %v1540 = vpop.f32.mrb[0].mxu0
        %v1541 = vadd.f32 0.0, %v1540
        %v1542 = vpop.f32.mrb[0].mxu0
        %1543 = vmatprep.mubr.bf16.mxu0 0
        %1544 = vmatmul.mubr.bf16.gmra.mrb[0].mxu0 %v1473
        %v1545 = vpop.f32.mrb[0].mxu0
        %v1546 = vadd.f32 0.0, %v1545
        %v1547 = vpop.f32.mrb[0].mxu0
        %v1548 = vpop.f32.mrb[0].mxu0
        %v1549 = vadd.f32 0.0, %v1548
        %v1550 = vpop.f32.mrb[0].mxu0
        %1551 = vmatprep.mubr.bf16.mxu0 0
        %1552 = vmatmul.mubr.bf16.gmra.mrb[0].mxu0 %v1476
        %v1553 = vpop.f32.mrb[0].mxu0
        %v1554 = vadd.f32 0.0, %v1553
        %v1555 = vpop.f32.mrb[0].mxu0
        %v1556 = vpop.f32.mrb[0].mxu0
        %v1557 = vadd.f32 0.0, %v1556
        %v1558 = vpop.f32.mrb[0].mxu0
        %1559 = vmatprep.mubr.bf16.mxu0 0
        %1560 = vmatmul.mubr.bf16.gmra.mrb[0].mxu0 %v1479
        %v1561 = vpop.f32.mrb[0].mxu0
        %v1562 = vadd.f32 0.0, %v1561
        %v1563 = vpop.f32.mrb[0].mxu0
        %v1564 = vpop.f32.mrb[0].mxu0
        %v1565 = vadd.f32 0.0, %v1564
        %v1566 = vpop.f32.mrb[0].mxu0
        %1567 = vmatprep.mubr.bf16.mxu0 0
        %1568 = vmatmul.mubr.bf16.gmra.mrb[0].mxu0 %v1482
        %v1569 = vpop.f32.mrb[0].mxu0
        %v1570 = vadd.f32 0.0, %v1569
        %v1571 = vpop.f32.mrb[0].mxu0
        %v1572 = vpop.f32.mrb[0].mxu0
        %v1573 = vadd.f32 0.0, %v1572
        %v1574 = vpop.f32.mrb[0].mxu0
        %1575 = vmatprep.mubr.bf16.mxu0 0
        %1576 = vmatmul.mubr.bf16.gmra.mrb[0].mxu0 %v1485
        %v1577 = vpop.f32.mrb[0].mxu0
        %v1578 = vadd.f32 0.0, %v1577
        %v1579 = vpop.f32.mrb[0].mxu0
        %v1580 = vpop.f32.mrb[0].mxu0
        %v1581 = vadd.f32 0.0, %v1580
        %v1582 = vpop.f32.mrb[0].mxu0
        %1583 = vdwg.mxu0
        %v1584 = vrot.slane %v1522, 1
        %v1585 = vrot.slane %v1525, 1
        %v1586 = vrot.slane %v1530, 1
        %v1587 = vrot.slane %v1533, 1
        %v1588 = vrot.slane %v1538, 1
        %v1589 = vrot.slane %v1541, 1
        %v1590 = vrot.slane %v1546, 1
        %v1591 = vrot.slane %v1549, 1
        %v1592 = vrot.slane %v1554, 1
        %v1593 = vrot.slane %v1557, 1
        %v1594 = vrot.slane %v1562, 1
        %v1595 = vrot.slane %v1565, 1
        %v1596 = vrot.slane %v1570, 1
        %v1597 = vrot.slane %v1573, 1
        %v1598 = vrot.slane %v1578, 1
        %v1599 = vrot.slane %v1581, 1
        %v1600 = vsel %vm434, %v1598, %v1599
        %v1601 = vsel %vm434, %v1597, %v1598
        %v1602 = vsel %vm434, %v1596, %v1597
        %v1603 = vsel %vm434, %v1595, %v1596
        %v1604 = vsel %vm434, %v1594, %v1595
        %v1605 = vsel %vm434, %v1593, %v1594
        %v1606 = vsel %vm434, %v1592, %v1593
        %v1607 = vsel %vm434, %v1591, %v1592
        %v1608 = vsel %vm434, %v1590, %v1591
        %v1609 = vsel %vm434, %v1589, %v1590
        %v1610 = vsel %vm434, %v1588, %v1589
        %v1611 = vsel %vm434, %v1587, %v1588
        %v1612 = vsel %vm434, %v1586, %v1587
        %v1613 = vsel %vm434, %v1585, %v1586
        %v1614 = vsel %vm434, %v1584, %v1585
        %v1615 = vsel %vm434, %v1599, %v1584
        %v1624 = vunpack.c.l.b16 %v1382
        %v1625 = vunpack.c.l.b16 %v1383
        %v1626 = vunpack.c.l.b16 %v1384
        %v1627 = vunpack.c.l.b16 %v1385
        %v1628 = vunpack.c.l.b16 %v1386
        %v1629 = vunpack.c.l.b16 %v1387
        %v1630 = vunpack.c.l.b16 %v1388
        %v1631 = vunpack.c.l.b16 %v1389
        %v1632 = vpack.c.b16 %v1625, %v1624
        %v1633 = vpack.c.b16 %v1627, %v1626
        %v1634 = vpack.c.b16 %v1629, %v1628
        %v1635 = vpack.c.b16 %v1631, %v1630
        %1640 = vmatprep.subr.bf16.mxu0 0
        %1641 = vmatpush1.bf16.msra.mxu0 %v1632
        %1642 = vmatprep.subr.bf16.mxu0 0
        %1643 = vmatpush1.bf16.msra.mxu0 %v1633
        %1644 = vmatprep.subr.bf16.mxu0 0
        %1645 = vmatpush1.bf16.msra.mxu0 %v1634
        %1646 = vmatprep.subr.bf16.mxu0 0
        %1647 = vmatpush1.bf16.msra.mxu0 %v1635
        %1648 = vmatprep.subr.bf16.mxu0 0
        %1649 = vmatpush1.bf16.msra.mxu0 0
        %1650 = vmatprep.subr.bf16.mxu0 0
        %1651 = vmatpush1.bf16.msra.mxu0 0
        %1652 = vmatprep.subr.bf16.mxu0 0
        %1653 = vmatpush1.bf16.msra.mxu0 0
        %1654 = vmatprep.subr.bf16.mxu0 0
        %1655 = vmatpush1.bf16.msra.mxu0 0
        %1656 = vmatprep.subr.bf16.mxu0 0
        %1657 = vmatpush1.bf16.msra.mxu0 0
        %1658 = vmatprep.subr.bf16.mxu0 0
        %1659 = vmatpush1.bf16.msra.mxu0 0
        %1660 = vmatprep.subr.bf16.mxu0 0
        %1661 = vmatpush1.bf16.msra.mxu0 0
        %1662 = vmatprep.subr.bf16.mxu0 0
        %1663 = vmatpush1.bf16.msra.mxu0 0
        %1664 = vmatprep.subr.bf16.mxu0 0
        %1665 = vmatpush1.bf16.msra.mxu0 0
        %1666 = vmatprep.subr.bf16.mxu0 0
        %1667 = vmatpush1.bf16.msra.mxu0 0
        %1668 = vmatprep.subr.bf16.mxu0 0
        %1669 = vmatpush1.bf16.msra.mxu0 0
        %1670 = vmatprep.subr.bf16.mxu0 0
        %1671 = vmatpush1.bf16.msra.mxu0 0
        %1672 = vmatprep.mubr.bf16.mxu0 0
        %1673 = vmatmul.mubr.bf16.gmra.mrb[0].mxu0 %v1464
        %v1674 = vpop.f32.mrb[0].mxu0
        %v1675 = vadd.f32 %v1614, %v1674
        %v1676 = vpop.f32.mrb[0].mxu0
        %v1677 = vpop.f32.mrb[0].mxu0
        %v1678 = vadd.f32 %v1613, %v1677
        %v1679 = vpop.f32.mrb[0].mxu0
        %1680 = vmatprep.mubr.bf16.mxu0 0
        %1681 = vmatmul.mubr.bf16.gmra.mrb[0].mxu0 %v1467
        %v1682 = vpop.f32.mrb[0].mxu0
        %v1683 = vadd.f32 %v1612, %v1682
        %v1684 = vpop.f32.mrb[0].mxu0
        %v1685 = vpop.f32.mrb[0].mxu0
        %v1686 = vadd.f32 %v1611, %v1685
        %v1687 = vpop.f32.mrb[0].mxu0
        %1688 = vmatprep.mubr.bf16.mxu0 0
        %1689 = vmatmul.mubr.bf16.gmra.mrb[0].mxu0 %v1470
        %v1690 = vpop.f32.mrb[0].mxu0
        %v1691 = vadd.f32 %v1610, %v1690
        %v1692 = vpop.f32.mrb[0].mxu0
        %v1693 = vpop.f32.mrb[0].mxu0
        %v1694 = vadd.f32 %v1609, %v1693
        %v1695 = vpop.f32.mrb[0].mxu0
        %1696 = vmatprep.mubr.bf16.mxu0 0
        %1697 = vmatmul.mubr.bf16.gmra.mrb[0].mxu0 %v1473
        %v1698 = vpop.f32.mrb[0].mxu0
        %v1699 = vadd.f32 %v1608, %v1698
        %v1700 = vpop.f32.mrb[0].mxu0
        %v1701 = vpop.f32.mrb[0].mxu0
        %v1702 = vadd.f32 %v1607, %v1701
        %v1703 = vpop.f32.mrb[0].mxu0
        %1704 = vmatprep.mubr.bf16.mxu0 0
        %1705 = vmatmul.mubr.bf16.gmra.mrb[0].mxu0 %v1476
        %v1706 = vpop.f32.mrb[0].mxu0
        %v1707 = vadd.f32 %v1606, %v1706
        %v1708 = vpop.f32.mrb[0].mxu0
        %v1709 = vpop.f32.mrb[0].mxu0
        %v1710 = vadd.f32 %v1605, %v1709
        %v1711 = vpop.f32.mrb[0].mxu0
        %1712 = vmatprep.mubr.bf16.mxu0 0
        %1713 = vmatmul.mubr.bf16.gmra.mrb[0].mxu0 %v1479
        %v1714 = vpop.f32.mrb[0].mxu0
        %v1715 = vadd.f32 %v1604, %v1714
        %v1716 = vpop.f32.mrb[0].mxu0
        %v1717 = vpop.f32.mrb[0].mxu0
        %v1718 = vadd.f32 %v1603, %v1717
        %v1719 = vpop.f32.mrb[0].mxu0
        %1720 = vmatprep.mubr.bf16.mxu0 0
        %1721 = vmatmul.mubr.bf16.gmra.mrb[0].mxu0 %v1482
        %v1722 = vpop.f32.mrb[0].mxu0
        %v1723 = vadd.f32 %v1602, %v1722
        %v1724 = vpop.f32.mrb[0].mxu0
        %v1725 = vpop.f32.mrb[0].mxu0
        %v1726 = vadd.f32 %v1601, %v1725
        %v1727 = vpop.f32.mrb[0].mxu0
        %1728 = vmatprep.mubr.bf16.mxu0 0
        %1729 = vmatmul.mubr.bf16.gmra.mrb[0].mxu0 %v1485
        %v1730 = vpop.f32.mrb[0].mxu0
        %v1731 = vadd.f32 %v1600, %v1730
        %v1732 = vpop.f32.mrb[0].mxu0
        %v1733 = vpop.f32.mrb[0].mxu0
        %v1734 = vadd.f32 %v1615, %v1733
        %v1735 = vpop.f32.mrb[0].mxu0
        %1736 = vdwg.mxu0
        %s1737 = scalar_lea.vmem %s1, 256
        %v1738 = vld [vmem:[%s1737] sm:$0xf]
        %v1739 = vld [vmem:[%s1737 + $0x4] sm:$0xf]
        %v1740 = vld [vmem:[%s1737 + $0x8] sm:$0xf]
        %v1741 = vld [vmem:[%s1737 + $0xc] sm:$0xf]
        %v1742 = vld [vmem:[%s1737 + $0x10] sm:$0xf]
        %v1743 = vld [vmem:[%s1737 + $0x14] sm:$0xf]
        %v1744 = vld [vmem:[%s1737 + $0x18] sm:$0xf]
        %v1745 = vld [vmem:[%s1737 + $0x1c] sm:$0xf]
        %v1754 = vunpack.c.l.b16 %v1738
        %v1755 = vunpack.c.l.b16 %v1739
        %v1756 = vunpack.c.l.b16 %v1740
        %v1757 = vunpack.c.l.b16 %v1741
        %v1758 = vunpack.c.l.b16 %v1742
        %v1759 = vunpack.c.l.b16 %v1743
        %v1760 = vunpack.c.l.b16 %v1744
        %v1761 = vunpack.c.l.b16 %v1745
        %v1762 = vpack.c.b16 %v1755, %v1754
        %v1763 = vpack.c.b16 %v1757, %v1756
        %v1764 = vpack.c.b16 %v1759, %v1758
        %v1765 = vpack.c.b16 %v1761, %v1760
        %1770 = vmatprep.subr.bf16.mxu0 0
        %1771 = vmatpush1.bf16.msra.mxu0 %v1762
        %1772 = vmatprep.subr.bf16.mxu0 0
        %1773 = vmatpush1.bf16.msra.mxu0 %v1763
        %1774 = vmatprep.subr.bf16.mxu0 0
        %1775 = vmatpush1.bf16.msra.mxu0 %v1764
        %1776 = vmatprep.subr.bf16.mxu0 0
        %1777 = vmatpush1.bf16.msra.mxu0 %v1765
        %1778 = vmatprep.subr.bf16.mxu0 0
        %1779 = vmatpush1.bf16.msra.mxu0 0
        %1780 = vmatprep.subr.bf16.mxu0 0
        %1781 = vmatpush1.bf16.msra.mxu0 0
        %1782 = vmatprep.subr.bf16.mxu0 0
        %1783 = vmatpush1.bf16.msra.mxu0 0
        %1784 = vmatprep.subr.bf16.mxu0 0
        %1785 = vmatpush1.bf16.msra.mxu0 0
        %1786 = vmatprep.subr.bf16.mxu0 0
        %1787 = vmatpush1.bf16.msra.mxu0 0
        %1788 = vmatprep.subr.bf16.mxu0 0
        %1789 = vmatpush1.bf16.msra.mxu0 0
        %1790 = vmatprep.subr.bf16.mxu0 0
        %1791 = vmatpush1.bf16.msra.mxu0 0
        %1792 = vmatprep.subr.bf16.mxu0 0
        %1793 = vmatpush1.bf16.msra.mxu0 0
        %1794 = vmatprep.subr.bf16.mxu0 0
        %1795 = vmatpush1.bf16.msra.mxu0 0
        %1796 = vmatprep.subr.bf16.mxu0 0
        %1797 = vmatpush1.bf16.msra.mxu0 0
        %1798 = vmatprep.subr.bf16.mxu0 0
        %1799 = vmatpush1.bf16.msra.mxu0 0
        %1800 = vmatprep.subr.bf16.mxu0 0
        %1801 = vmatpush1.bf16.msra.mxu0 0
        %1802 = vmatprep.mubr.bf16.mxu0 0
        %1803 = vmatmul.mubr.bf16.gmra.mrb[0].mxu0 %v1464
        %v1804 = vpop.f32.mrb[0].mxu0
        %v1805 = vadd.f32 0.0, %v1804
        %v1806 = vpop.f32.mrb[0].mxu0
        %v1807 = vpop.f32.mrb[0].mxu0
        %v1808 = vadd.f32 0.0, %v1807
        %v1809 = vpop.f32.mrb[0].mxu0
        %1810 = vmatprep.mubr.bf16.mxu0 0
        %1811 = vmatmul.mubr.bf16.gmra.mrb[0].mxu0 %v1467
        %v1812 = vpop.f32.mrb[0].mxu0
        %v1813 = vadd.f32 0.0, %v1812
        %v1814 = vpop.f32.mrb[0].mxu0
        %v1815 = vpop.f32.mrb[0].mxu0
        %v1816 = vadd.f32 0.0, %v1815
        %v1817 = vpop.f32.mrb[0].mxu0
        %1818 = vmatprep.mubr.bf16.mxu0 0
        %1819 = vmatmul.mubr.bf16.gmra.mrb[0].mxu0 %v1470
        %v1820 = vpop.f32.mrb[0].mxu0
        %v1821 = vadd.f32 0.0, %v1820
        %v1822 = vpop.f32.mrb[0].mxu0
        %v1823 = vpop.f32.mrb[0].mxu0
        %v1824 = vadd.f32 0.0, %v1823
        %v1825 = vpop.f32.mrb[0].mxu0
        %1826 = vmatprep.mubr.bf16.mxu0 0
        %1827 = vmatmul.mubr.bf16.gmra.mrb[0].mxu0 %v1473
        %v1828 = vpop.f32.mrb[0].mxu0
        %v1829 = vadd.f32 0.0, %v1828
        %v1830 = vpop.f32.mrb[0].mxu0
        %v1831 = vpop.f32.mrb[0].mxu0
        %v1832 = vadd.f32 0.0, %v1831
        %v1833 = vpop.f32.mrb[0].mxu0
        %1834 = vmatprep.mubr.bf16.mxu0 0
        %1835 = vmatmul.mubr.bf16.gmra.mrb[0].mxu0 %v1476
        %v1836 = vpop.f32.mrb[0].mxu0
        %v1837 = vadd.f32 0.0, %v1836
        %v1838 = vpop.f32.mrb[0].mxu0
        %v1839 = vpop.f32.mrb[0].mxu0
        %v1840 = vadd.f32 0.0, %v1839
        %v1841 = vpop.f32.mrb[0].mxu0
        %1842 = vmatprep.mubr.bf16.mxu0 0
        %1843 = vmatmul.mubr.bf16.gmra.mrb[0].mxu0 %v1479
        %v1844 = vpop.f32.mrb[0].mxu0
        %v1845 = vadd.f32 0.0, %v1844
        %v1846 = vpop.f32.mrb[0].mxu0
        %v1847 = vpop.f32.mrb[0].mxu0
        %v1848 = vadd.f32 0.0, %v1847
        %v1849 = vpop.f32.mrb[0].mxu0
        %1850 = vmatprep.mubr.bf16.mxu0 0
        %1851 = vmatmul.mubr.bf16.gmra.mrb[0].mxu0 %v1482
        %v1852 = vpop.f32.mrb[0].mxu0
        %v1853 = vadd.f32 0.0, %v1852
        %v1854 = vpop.f32.mrb[0].mxu0
        %v1855 = vpop.f32.mrb[0].mxu0
        %v1856 = vadd.f32 0.0, %v1855
        %v1857 = vpop.f32.mrb[0].mxu0
        %1858 = vmatprep.mubr.bf16.mxu0 0
        %1859 = vmatmul.mubr.bf16.gmra.mrb[0].mxu0 %v1485
        %v1860 = vpop.f32.mrb[0].mxu0
        %v1861 = vadd.f32 0.0, %v1860
        %v1862 = vpop.f32.mrb[0].mxu0
        %v1863 = vpop.f32.mrb[0].mxu0
        %v1864 = vadd.f32 0.0, %v1863
        %v1865 = vpop.f32.mrb[0].mxu0
        %1866 = vdwg.mxu0
        %v1867 = vrot.slane %v1805, 2
        %v1868 = vrot.slane %v1808, 2
        %v1869 = vrot.slane %v1813, 2
        %v1870 = vrot.slane %v1816, 2
        %v1871 = vrot.slane %v1821, 2
        %v1872 = vrot.slane %v1824, 2
        %v1873 = vrot.slane %v1829, 2
        %v1874 = vrot.slane %v1832, 2
        %v1875 = vrot.slane %v1837, 2
        %v1876 = vrot.slane %v1840, 2
        %v1877 = vrot.slane %v1845, 2
        %v1878 = vrot.slane %v1848, 2
        %v1879 = vrot.slane %v1853, 2
        %v1880 = vrot.slane %v1856, 2
        %v1881 = vrot.slane %v1861, 2
        %v1882 = vrot.slane %v1864, 2
        %v1883 = vsel %vm718, %v1881, %v1882
        %v1884 = vsel %vm718, %v1880, %v1881
        %v1885 = vsel %vm718, %v1879, %v1880
        %v1886 = vsel %vm718, %v1878, %v1879
        %v1887 = vsel %vm718, %v1877, %v1878
        %v1888 = vsel %vm718, %v1876, %v1877
        %v1889 = vsel %vm718, %v1875, %v1876
        %v1890 = vsel %vm718, %v1874, %v1875
        %v1891 = vsel %vm718, %v1873, %v1874
        %v1892 = vsel %vm718, %v1872, %v1873
        %v1893 = vsel %vm718, %v1871, %v1872
        %v1894 = vsel %vm718, %v1870, %v1871
        %v1895 = vsel %vm718, %v1869, %v1870
        %v1896 = vsel %vm718, %v1868, %v1869
        %v1897 = vsel %vm718, %v1867, %v1868
        %v1898 = vsel %vm718, %v1882, %v1867
        %v1899 = vadd.f32 %v1675, %v1897
        %v1900 = vadd.f32 %v1678, %v1896
        %v1901 = vadd.f32 %v1683, %v1895
        %v1902 = vadd.f32 %v1686, %v1894
        %v1903 = vadd.f32 %v1691, %v1893
        %v1904 = vadd.f32 %v1694, %v1892
        %v1905 = vadd.f32 %v1699, %v1891
        %v1906 = vadd.f32 %v1702, %v1890
        %v1907 = vadd.f32 %v1707, %v1889
        %v1908 = vadd.f32 %v1710, %v1888
        %v1909 = vadd.f32 %v1715, %v1887
        %v1910 = vadd.f32 %v1718, %v1886
        %v1911 = vadd.f32 %v1723, %v1885
        %v1912 = vadd.f32 %v1726, %v1884
        %v1913 = vadd.f32 %v1731, %v1883
        %v1914 = vadd.f32 %v1734, %v1898
        %v1915 = vld [vmem:[#allocation2] sm:$0xff]
        %v1916 = vld [vmem:[#allocation2 + $0x8] sm:$0xff]
        %v1917 = vld [vmem:[#allocation2 + $0x10] sm:$0xff]
        %v1918 = vld [vmem:[#allocation2 + $0x18] sm:$0xff]
        %v1919 = vld [vmem:[#allocation2 + $0x20] sm:$0xff]
        %v1920 = vld [vmem:[#allocation2 + $0x28] sm:$0xff]
        %v1921 = vld [vmem:[#allocation2 + $0x30] sm:$0xff]
        %v1922 = vld [vmem:[#allocation2 + $0x38] sm:$0xff]
        %v1923 = vld [vmem:[#allocation2 + $0x40] sm:$0xff]
        %v1924 = vld [vmem:[#allocation2 + $0x48] sm:$0xff]
        %v1925 = vld [vmem:[#allocation2 + $0x50] sm:$0xff]
        %v1926 = vld [vmem:[#allocation2 + $0x58] sm:$0xff]
        %v1927 = vld [vmem:[#allocation2 + $0x60] sm:$0xff]
        %v1928 = vld [vmem:[#allocation2 + $0x68] sm:$0xff]
        %v1929 = vld [vmem:[#allocation2 + $0x70] sm:$0xff]
        %v1930 = vld [vmem:[#allocation2 + $0x78] sm:$0xff]
        %v1931 = vadd.f32 %v1915, %v1899
        %v1932 = vadd.f32 %v1916, %v1900
        %v1933 = vadd.f32 %v1917, %v1901
        %v1934 = vadd.f32 %v1918, %v1902
        %v1935 = vadd.f32 %v1919, %v1903
        %v1936 = vadd.f32 %v1920, %v1904
        %v1937 = vadd.f32 %v1921, %v1905
        %v1938 = vadd.f32 %v1922, %v1906
        %v1939 = vadd.f32 %v1923, %v1907
        %v1940 = vadd.f32 %v1924, %v1908
        %v1941 = vadd.f32 %v1925, %v1909
        %v1942 = vadd.f32 %v1926, %v1910
        %v1943 = vadd.f32 %v1927, %v1911
        %v1944 = vadd.f32 %v1928, %v1912
        %v1945 = vadd.f32 %v1929, %v1913
        %v1946 = vadd.f32 %v1930, %v1914
        %1947 = vst.msk [vmem:[#allocation2] sm:$0xff] %vm294, %v1931
        %1948 = vst.msk [vmem:[#allocation2 + $0x8] sm:$0xff] %vm294, %v1932
        %1949 = vst.msk [vmem:[#allocation2 + $0x10] sm:$0xff] %vm294, %v1933
        %1950 = vst.msk [vmem:[#allocation2 + $0x18] sm:$0xff] %vm294, %v1934
        %1951 = vst.msk [vmem:[#allocation2 + $0x20] sm:$0xff] %vm294, %v1935
        %1952 = vst.msk [vmem:[#allocation2 + $0x28] sm:$0xff] %vm294, %v1936
        %1953 = vst.msk [vmem:[#allocation2 + $0x30] sm:$0xff] %vm294, %v1937
        %1954 = vst.msk [vmem:[#allocation2 + $0x38] sm:$0xff] %vm294, %v1938
        %1955 = vst.msk [vmem:[#allocation2 + $0x40] sm:$0xff] %vm294, %v1939
        %1956 = vst.msk [vmem:[#allocation2 + $0x48] sm:$0xff] %vm294, %v1940
        %1957 = vst.msk [vmem:[#allocation2 + $0x50] sm:$0xff] %vm294, %v1941
        %1958 = vst.msk [vmem:[#allocation2 + $0x58] sm:$0xff] %vm294, %v1942
        %1959 = vst.msk [vmem:[#allocation2 + $0x60] sm:$0xff] %vm294, %v1943
        %1960 = vst.msk [vmem:[#allocation2 + $0x68] sm:$0xff] %vm294, %v1944
        %1961 = vst.msk [vmem:[#allocation2 + $0x70] sm:$0xff] %vm294, %v1945
        %1962 = vst.msk [vmem:[#allocation2 + $0x78] sm:$0xff] %vm294, %v1946
        %v1963 = vld [vmem:[%s2] sm:$0x1]
        %v1964 = vld [vmem:[%s3] sm:$0x1]
        %v1965 = vld [vmem:[#allocation2] sm:$0xff]
        %v1967 = vlaneseq
        %v1968 = vshrl.u32 %v1967, 7
        %v1969 = vsub.s32 0, %v1968
        %v1970 = vrot.slane %v1963, %v1969
        %v1972 = vmul.f32 %v1965, %v1970
        %v1974 = vlaneseq
        %v1975 = vshrl.u32 %v1974, 7
        %v1976 = vsub.s32 0, %v1975
        %v1977 = vrot.slane %v1964, %v1976
        %v1979 = vadd.f32 %v1972, %v1977
        %v1980 = vpack.c.bf16 %v1979, %v1979
        %vm1981 = vcmask 519168
        %1982 = vst.msk [vmem:[%s190] sm:$0xf] %vm1981, %v1980
        %v1983 = vld [vmem:[#allocation2 + $0x10] sm:$0xff]
        %v1984 = vmul.f32 %v1983, %v1970
        %v1985 = vadd.f32 %v1984, %v1977
        %v1986 = vpack.c.bf16 %v1985, %v1985
        %s1987 = scalar_lea.vmem %s190, 4 [#allocation3]
        %1988 = vst.msk [vmem:[%s1987] sm:$0xf] %vm1981, %v1986
        %v1989 = vld [vmem:[#allocation2 + $0x20] sm:$0xff]
        %v1990 = vmul.f32 %v1989, %v1970
        %v1991 = vadd.f32 %v1990, %v1977
        %v1992 = vpack.c.bf16 %v1991, %v1991
        %s1993 = scalar_lea.vmem %s190, 8 [#allocation3]
        %1994 = vst.msk [vmem:[%s1993] sm:$0xf] %vm1981, %v1992
        %v1995 = vld [vmem:[#allocation2 + $0x30] sm:$0xff]
        %v1996 = vmul.f32 %v1995, %v1970
        %v1997 = vadd.f32 %v1996, %v1977
        %v1998 = vpack.c.bf16 %v1997, %v1997
        %s1999 = scalar_lea.vmem %s190, 12 [#allocation3]
        %2000 = vst.msk [vmem:[%s1999] sm:$0xf] %vm1981, %v1998
        %v2001 = vld [vmem:[#allocation2 + $0x40] sm:$0xff]
        %v2002 = vmul.f32 %v2001, %v1970
        %v2003 = vadd.f32 %v2002, %v1977
        %v2004 = vpack.c.bf16 %v2003, %v2003
        %s2005 = scalar_lea.vmem %s190, 16 [#allocation3]
        %2006 = vst.msk [vmem:[%s2005] sm:$0xf] %vm1981, %v2004
        %v2007 = vld [vmem:[#allocation2 + $0x50] sm:$0xff]
        %v2008 = vmul.f32 %v2007, %v1970
        %v2009 = vadd.f32 %v2008, %v1977
        %v2010 = vpack.c.bf16 %v2009, %v2009
        %s2011 = scalar_lea.vmem %s190, 20 [#allocation3]
        %2012 = vst.msk [vmem:[%s2011] sm:$0xf] %vm1981, %v2010
        %v2013 = vld [vmem:[#allocation2 + $0x60] sm:$0xff]
        %v2014 = vmul.f32 %v2013, %v1970
        %v2015 = vadd.f32 %v2014, %v1977
        %v2016 = vpack.c.bf16 %v2015, %v2015
        %s2017 = scalar_lea.vmem %s190, 24 [#allocation3]
        %2018 = vst.msk [vmem:[%s2017] sm:$0xf] %vm1981, %v2016
        %v2019 = vld [vmem:[#allocation2 + $0x70] sm:$0xff]
        %v2020 = vmul.f32 %v2019, %v1970
        %v2021 = vadd.f32 %v2020, %v1977
        %v2022 = vpack.c.bf16 %v2021, %v2021
        %s2023 = scalar_lea.vmem %s190, 28 [#allocation3]
        %2024 = vst.msk [vmem:[%s2023] sm:$0xf] %vm1981, %v2022
        %s2025 = sand.u32 %s115, 1
        %s2026 = scalar_lea.sflag [#allocation4], %s2025
        %s2027 = sand.u32 %s115, 1
        %s2028 = smul.addr %s2027, 32
        %s2029 = scalar_lea.vmem [#allocation3], %s2028
        // Predicated region
        $region37: #{tpu_custom_call.1} parent=35 // pred_check
          %p2030 = pneg %p125
        $region38: #{tpu_custom_call.1} parent=35 // pred_check_branch
          %2032 = sbr.rel (%p2030) target = $region40
        $region39: #{tpu_custom_call.1} parent=35 // pred_region
          %s2034 = ssub.s32 512, 512
          %2035 = vsyncadd %s2026, %s2034
          %s2036 = smul.addr %s18, 8
          %s2037 = smul.addr %s2036, 64
          %s2038 = scalar_lea.hbm %s4, %s2037
          %s2039 = sshll.u32 %s2029, 4
          %s2040 = int_to_ptr.vmem [resolvable:$true] %s2039
          %2045 = dma.vmem_to_hbm [thread:$0]  %s2040, 512, %s2038, %s2026, 64, 64, 4
        $region40: #{tpu_custom_call.1} parent=35 // pred_fallthru
          _
      $region36: #{tpu_custom_call.1} parent=5 // pred_fallthru
        _
      %p2046 = scmp.le.s32.totalorder 2, %s13
      // Predicated region
      $region41: #{tpu_custom_call.1} parent=5 // pred_check
        %p2047 = pneg %p2046
      $region42: #{tpu_custom_call.1} parent=5 // pred_check_branch
        %2049 = sbr.rel (%p2047) target = $region44
      $region43: #{tpu_custom_call.1} parent=5 // pred_region
        %s2050 = ssub.s32 %s13, 2
        // Predicated region
        $region45: #{tpu_custom_call.1} parent=43 // pred_check
          %p2051 = pneg %p131
        $region46: #{tpu_custom_call.1} parent=43 // pred_check_branch
          %2053 = sbr.rel (%p2051) target = $region48
        $region47: #{tpu_custom_call.1} parent=43 // pred_region
          %s2054 = sand.u32 %s116, 1
          %s2055 = scalar_lea.sflag [#allocation4], %s2054
          %s2056 = sand.u32 %s116, 1
          %s2057 = smul.addr %s2056, 32
          %s2058 = scalar_lea.vmem [#allocation3], %s2057
          %2059 = dma.done %s2055, 512
        $region48: #{tpu_custom_call.1} parent=43 // pred_fallthru
          _
      $region44: #{tpu_custom_call.1} parent=5 // pred_fallthru
        _
    $region6: #{tpu_custom_call.1} parent=1 // loop_footer
      %s17 = sadd.s32 1, %s13
    $region7: #{tpu_custom_call.1} parent=1 // loop_footer_branch
      %12 = sbr.rel target = $region3
    $region8: #{tpu_custom_call.1} parent=1 // loop_exit
      _
    %2060 = vsyncpa [#allocation4], 1
    %s2061 = scalar_lea.sflag [#allocation4], 1
    %2062 = vsyncpa %s2061, 1

</llo_original>
